<compile_context>
chip_gen: v5e
topology: v5e:2x2
jax: 0.10.0
libtpu: 0.0.40
codegen_flags: <defaults>
</compile_context>

<pallas_src>
import jax
import jax.numpy as jnp
from jax.experimental import pallas as pl
from jax.experimental.pallas import tpu as pltpu


def _round_up(n, m):
    return ((n + m - 1) // m) * m


def _pick_tile(n, candidates):
    for c in candidates:
        if c <= n and n % c == 0:
            return c
    return n


# --------------- Kernel 1: LSTM recurrence (single invocation) ---------------

def _lstm_recurrence_kernel(x_ref, wih_ref, whh_ref, b_ref, h_out_ref, gx_sc):
    # x_ref:     (T, Bp, Ep)
    # wih_ref:   (Ep, 4*Hp)   W_ih^T (gate-major columns [i|f|g|o])
    # whh_ref:   (Hp, 4*Hp)   W_hh^T
    # b_ref:     (1, 4*Hp)    b_ih + b_hh
    # h_out_ref: (T, Bp, Hp)  hidden states for every timestep
    # gx_sc:     (T, Bp, 4*Hp) VMEM scratch for the hoisted input-gate matmul
    T, Bp, Ep = x_ref.shape
    Hp = whh_ref.shape[0]

    # Hoisted input-to-gates matmul for ALL timesteps: one big MXU matmul.
    x_flat = x_ref[...].reshape(T * Bp, Ep)
    gx = jnp.dot(x_flat, wih_ref[...], preferred_element_type=jnp.float32)
    gx = gx + b_ref[...]
    gx_sc[...] = gx.reshape(T, Bp, 4 * Hp)

    w_hh = whh_ref[...]

    def step(t, carry):
        h_prev, c_prev = carry
        gates = gx_sc[t] + jnp.dot(h_prev, w_hh,
                                   preferred_element_type=jnp.float32)
        # Hp is a multiple of 128 -> every gate slice is lane-aligned (full
        # vregs on the VPU, sigmoid/tanh on the EUP).  Gate order: [i, f, g, o].
        i_g = jax.nn.sigmoid(gates[:, 0 * Hp:1 * Hp])
        f_g = jax.nn.sigmoid(gates[:, 1 * Hp:2 * Hp])
        g_g = jnp.tanh(gates[:, 2 * Hp:3 * Hp])
        o_g = jax.nn.sigmoid(gates[:, 3 * Hp:4 * Hp])
        c_new = f_g * c_prev + i_g * g_g
        h_new = o_g * jnp.tanh(c_new)
        h_out_ref[t] = h_new               # lane-dense (Bp, Hp) store
        return (h_new, c_new)

    zeros = jnp.zeros((Bp, Hp), jnp.float32)
    jax.lax.fori_loop(0, T, step, (zeros, zeros), unroll=True)


def lstm_recurrence_pallas(x_p, w_ih_t, w_hh_t, b_gates):
    """x_p: (T, Bp, Ep) padded time-major input -> (T, Bp, Hp) hidden states."""
    T, Bp, Ep = x_p.shape
    Hp = w_hh_t.shape[0]
    return pl.pallas_call(
        _lstm_recurrence_kernel,
        out_shape=jax.ShapeDtypeStruct((T, Bp, Hp), jnp.float32),
        grid_spec=pltpu.PrefetchScalarGridSpec(
            num_scalar_prefetch=0,
            grid=(1,),                     # single invocation; loop in-kernel
            in_specs=[
                pl.BlockSpec((T, Bp, Ep), lambda i: (0, 0, 0)),   # x (all T)
                pl.BlockSpec((Ep, 4 * Hp), lambda i: (0, 0)),     # W_ih^T
                pl.BlockSpec((Hp, 4 * Hp), lambda i: (0, 0)),     # W_hh^T
                pl.BlockSpec((1, 4 * Hp), lambda i: (0, 0)),      # bias
            ],
            out_specs=pl.BlockSpec((T, Bp, Hp), lambda i: (0, 0, 0)),
            scratch_shapes=[pltpu.VMEM((T, Bp, 4 * Hp), jnp.float32)],
        ),
        compiler_params=pltpu.CompilerParams(
            dimension_semantics=("arbitrary",)),
    )(x_p, w_ih_t, w_hh_t, b_gates)


# --------- Kernel 2: hoisted vocab projection (fully parallel matmul) --------

def _projection_kernel(h_ref, w_ref, b_ref, o_ref):
    o_ref[...] = (jnp.dot(h_ref[...], w_ref[...],
                          preferred_element_type=jnp.float32)
                  + b_ref[...]).astype(o_ref.dtype)


def project_pallas(h_flat, w_out_t, b_out):
    """h_flat: (M, Hp) = (T*Bp, Hp); returns (M, Vp) logits."""
    M, Hp = h_flat.shape
    Vp = w_out_t.shape[1]
    tm = _pick_tile(M, (512, 256, 128, 64, 32, 16, 8))
    tn = _pick_tile(Vp, (512, 256, 128))
    grid = (M // tm, Vp // tn)
    return pl.pallas_call(
        _projection_kernel,
        out_shape=jax.ShapeDtypeStruct((M, Vp), jnp.float32),
        grid_spec=pltpu.PrefetchScalarGridSpec(
            num_scalar_prefetch=0,
            grid=grid,
            in_specs=[
                pl.BlockSpec((tm, Hp), lambda i, j: (i, 0)),   # hidden rows
                pl.BlockSpec((Hp, tn), lambda i, j: (0, j)),   # W_out^T tile
                pl.BlockSpec((1, tn), lambda i, j: (0, j)),    # bias tile
            ],
            out_specs=pl.BlockSpec((tm, tn), lambda i, j: (i, j)),
        ),
        compiler_params=pltpu.CompilerParams(
            dimension_semantics=("parallel", "parallel")),
    )(h_flat, w_out_t, b_out)


# ------------------------------- Wrapper -------------------------------------

def decoder_rnn_forward(features, captions, kparams, vocab_size):
    """features: (B, E) f32; captions: (B, T_cap) int32 -> (B, T_cap, V)."""
    # Glue: embedding gather + concat (captions[:, :-1], then prepend features).
    emb = kparams["embedding"][captions[:, :-1]]                 # (B, T-1, E)
    x = jnp.concatenate([features[:, None, :], emb], axis=1)     # (B, T, E)
    x_tm = jnp.transpose(x, (1, 0, 2)).astype(jnp.float32)       # (T, B, E)
    T, B, E = x_tm.shape

    Ep = kparams["w_ih_t"].shape[0]
    Hp = kparams["w_hh_t"].shape[0]
    Vp = kparams["w_out_t"].shape[1]
    Bp = _round_up(B, 8)

    # Zero-pad batch (sublane) and embed (lane) dims; padded lanes/rows stay
    # zero through the recurrence and are sliced off below.
    x_p = jnp.zeros((T, Bp, Ep), jnp.float32).at[:, :B, :E].set(x_tm)

    h_all = lstm_recurrence_pallas(
        x_p, kparams["w_ih_t"], kparams["w_hh_t"], kparams["b_gates"])
    h_flat = h_all.reshape(T * Bp, Hp)

    logits_flat = project_pallas(h_flat, kparams["w_out_t"], kparams["b_out"])
    logits = logits_flat.reshape(T, Bp, Vp)[:, :B, :vocab_size]  # drop padding
    return jnp.transpose(logits, (1, 0, 2))                      # (B, T, V)


# ---------------------------- Parameter helpers ------------------------------

def _make_raw_params(key, vocab_size, embed_size, hidden_size):
    """Raw params in PyTorch layout."""
    ks = jax.random.split(key, 6)
    return {
        "embedding": jax.random.normal(ks[0], (vocab_size, embed_size),
                                       jnp.float32) * 0.1,
        "w_ih": jax.random.normal(ks[1], (4 * hidden_size, embed_size),
                                  jnp.float32) * 0.1,
        "w_hh": jax.random.normal(ks[2], (4 * hidden_size, hidden_size),
                                  jnp.float32) * 0.1,
        "b_ih": jax.random.normal(ks[3], (4 * hidden_size,), jnp.float32) * 0.1,
        "b_hh": jax.random.normal(ks[4], (4 * hidden_size,), jnp.float32) * 0.1,
        "w_out": jax.random.normal(ks[5], (vocab_size, hidden_size),
                                   jnp.float32) * 0.1,
        "b_out": jnp.zeros((vocab_size,), jnp.float32),
    }


def _prep_kernel_params(raw, embed_size, hidden_size, vocab_size):
    """Pad to (8,128)-friendly shapes (gate-blockwise for H) and transpose."""
    E, H, V = embed_size, hidden_size, vocab_size
    Ep, Hp, Vp = _round_up(E, 128), _round_up(H, 128), _round_up(V, 128)

    w_ih = raw["w_ih"].reshape(4, H, E)
    w_ih_p = jnp.zeros((4, Hp, Ep), jnp.float32).at[:, :H, :E].set(w_ih)
    w_ih_t = w_ih_p.reshape(4 * Hp, Ep).T                       # (Ep, 4Hp)

    w_hh = raw["w_hh"].reshape(4, H, H)
    w_hh_p = jnp.zeros((4, Hp, Hp), jnp.float32).at[:, :H, :H].set(w_hh)
    w_hh_t = w_hh_p.reshape(4 * Hp, Hp).T                       # (Hp, 4Hp)

    b = (raw["b_ih"] + raw["b_hh"]).reshape(4, H)
    b_gates = jnp.zeros((4, Hp), jnp.float32).at[:, :H].set(b).reshape(1, 4 * Hp)

    w_out_p = jnp.zeros((Vp, Hp), jnp.float32).at[:V, :H].set(raw["w_out"])
    w_out_t = w_out_p.T                                         # (Hp, Vp)
    b_out = jnp.zeros((1, Vp), jnp.float32).at[0, :V].set(raw["b_out"])

    return {
        "embedding": raw["embedding"],
        "w_ih_t": w_ih_t,
        "w_hh_t": w_hh_t,
        "b_gates": b_gates,
        "w_out_t": w_out_t,
        "b_out": b_out,
    }


# ------------------------------ Reference ------------------------------------

def _reference_forward(features, captions, raw, hidden_size):
    """Pure-JAX reference (lax.scan LSTM) mirroring the PyTorch module."""
    emb = raw["embedding"][captions[:, :-1]]
    x = jnp.concatenate([features[:, None, :], emb], axis=1)     # (B, T, E)
    B = x.shape[0]
    H = hidden_size
    w_ih_t, w_hh_t = raw["w_ih"].T, raw["w_hh"].T
    b = (raw["b_ih"] + raw["b_hh"])[None, :]

    def step(carry, x_t):
        h, c = carry
        gates = x_t @ w_ih_t + h @ w_hh_t + b
        i = jax.nn.sigmoid(gates[:, 0 * H:1 * H])
        f = jax.nn.sigmoid(gates[:, 1 * H:2 * H])
        g = jnp.tanh(gates[:, 2 * H:3 * H])
        o = jax.nn.sigmoid(gates[:, 3 * H:4 * H])
        c = f * c + i * g
        h = o * jnp.tanh(c)
        return (h, c), h

    h0 = jnp.zeros((B, H), jnp.float32)
    c0 = jnp.zeros((B, H), jnp.float32)
    _, hs = jax.lax.scan(step, (h0, c0), jnp.transpose(x, (1, 0, 2)))
    logits = hs @ raw["w_out"].T + raw["b_out"][None, :]         # (T, B, V)
    return jnp.transpose(logits, (1, 0, 2))


# TODO(synk): DecoderRNN.sample() (greedy decode with data-dependent early
# break) is not implemented; only the training-time forward() is covered.

if __name__ == "__main__":
    batch_size = 2
    embed_size = 32
    hidden_size = 32
    vocab_size = 40
    cap_len = 8          # output time dim == cap_len

    key = jax.random.PRNGKey(0)
    k_par, k_feat, k_cap = jax.random.split(key, 3)

    raw = _make_raw_params(k_par, vocab_size, embed_size, hidden_size)
    kparams = _prep_kernel_params(raw, embed_size, hidden_size, vocab_size)

    features = jax.random.normal(k_feat, (batch_size, embed_size), jnp.float32)
    captions = jax.random.randint(k_cap, (batch_size, cap_len), 0, vocab_size,
                                  dtype=jnp.int32)

    out = decoder_rnn_forward(features, captions, kparams, vocab_size)
    out = jax.block_until_ready(out)

    ref = _reference_forward(features, captions, raw, hidden_size)
    assert out.shape == (batch_size, cap_len, vocab_size), out.shape
    assert jnp.allclose(out, ref, atol=1e-4, rtol=1e-4), \
        float(jnp.max(jnp.abs(out - ref)))

    print("KERNEL_OK")
</pallas_src>

<mosaic_0001>
module attributes {stable_mosaic.version = 11 : i64} {
  func.func @_lstm_recurrence_kernel(%arg0: i32, %arg1: memref<8x8x128xf32, #tpu.memory_space<vmem>>, %arg2: memref<128x512xf32, #tpu.memory_space<vmem>>, %arg3: memref<128x512xf32, #tpu.memory_space<vmem>>, %arg4: memref<1x512xf32, #tpu.memory_space<vmem>>, %arg5: memref<8x8x128xf32, #tpu.memory_space<vmem>>, %arg6: memref<8x8x512xf32, #tpu.memory_space<vmem>>) attributes {dimension_semantics = [#tpu.dimension_semantics<arbitrary>], iteration_bounds = array<i64: 1>, scalar_prefetch = 0 : i64, scratch_operands = 1 : i64, tpu.core_type = #tpu.core_type<tc>, window_params = [{pipeline_mode = #tpu.pipeline_mode<synchronous>, transform_indices = @transform_0, window_bounds = array<i64: 8, 8, 128>}, {pipeline_mode = #tpu.pipeline_mode<synchronous>, transform_indices = @transform_1, window_bounds = array<i64: 128, 512>}, {pipeline_mode = #tpu.pipeline_mode<synchronous>, transform_indices = @transform_2, window_bounds = array<i64: 128, 512>}, {pipeline_mode = #tpu.pipeline_mode<synchronous>, transform_indices = @transform_3, window_bounds = array<i64: 1, 512>}, {pipeline_mode = #tpu.pipeline_mode<synchronous>, transform_indices = @transform_4, window_bounds = array<i64: 8, 8, 128>}]} {
    %c0 = arith.constant 0 : index
    %c0_0 = arith.constant 0 : index
    %c0_1 = arith.constant 0 : index
    %0 = vector.load %arg1[%c0, %c0_0, %c0_1] : memref<8x8x128xf32, #tpu.memory_space<vmem>>, vector<8x8x128xf32>
    %1 = vector.shape_cast %0 : vector<8x8x128xf32> to vector<64x128xf32>
    %c0_2 = arith.constant 0 : index
    %c0_3 = arith.constant 0 : index
    %2 = vector.load %arg2[%c0_2, %c0_3] : memref<128x512xf32, #tpu.memory_space<vmem>>, vector<128x512xf32>
    %cst = arith.constant dense<0.000000e+00> : vector<64x512xf32>
    %3 = tpu.matmul %1, %2, %cst {dimension_numbers = #tpu.dot_dimension_numbers<[1], [0], [0], [1], [0, 0, 1, 1], [], []>} : vector<64x128xf32>, vector<128x512xf32>, vector<64x512xf32> -> vector<64x512xf32>
    %c0_4 = arith.constant 0 : index
    %c0_5 = arith.constant 0 : index
    %4 = vector.load %arg4[%c0_4, %c0_5] : memref<1x512xf32, #tpu.memory_space<vmem>>, vector<1x512xf32>
    %5 = vector.broadcast %4 : vector<1x512xf32> to vector<64x512xf32>
    %6 = arith.addf %3, %5 : vector<64x512xf32>
    %7 = vector.shape_cast %6 : vector<64x512xf32> to vector<8x8x512xf32>
    %c0_6 = arith.constant 0 : index
    %c0_7 = arith.constant 0 : index
    %c0_8 = arith.constant 0 : index
    %8 = vector.load %arg6[%c0_6, %c0_7, %c0_8] : memref<8x8x512xf32, #tpu.memory_space<vmem>>, vector<8x8x512xf32>
    tpu.vector_store %arg6[%c0_6, %c0_7, %c0_8], %7 {strides = array<i32>} : memref<8x8x512xf32, #tpu.memory_space<vmem>>, vector<8x8x512xf32>,
    %c0_9 = arith.constant 0 : index
    %c0_10 = arith.constant 0 : index
    %9 = vector.load %arg3[%c0_9, %c0_10] : memref<128x512xf32, #tpu.memory_space<vmem>>, vector<128x512xf32>
    %cst_11 = arith.constant 0.000000e+00 : f32
    %10 = vector.broadcast %cst_11 : f32 to vector<8x128xf32>
    %c0_i32 = arith.constant 0 : i32
    %11 = arith.index_cast %c0_i32 : i32 to index
    %c0_12 = arith.constant 0 : index
    %c0_13 = arith.constant 0 : index
    %12 = vector.load %arg6[%11, %c0_12, %c0_13] : memref<8x8x512xf32, #tpu.memory_space<vmem>>, vector<1x8x512xf32>
    %13 = vector.shape_cast %12 : vector<1x8x512xf32> to vector<8x512xf32>
    %cst_14 = arith.constant dense<0.000000e+00> : vector<8x512xf32>
    %14 = tpu.matmul %10, %9, %cst_14 {dimension_numbers = #tpu.dot_dimension_numbers<[1], [0], [0], [1], [0, 0, 1, 1], [], []>} : vector<8x128xf32>, vector<128x512xf32>, vector<8x512xf32> -> vector<8x512xf32>
    %15 = arith.addf %13, %14 : vector<8x512xf32>
    %16 = vector.extract_strided_slice %15 {offsets = [0, 0], sizes = [8, 128], strides = [1, 1]} : vector<8x512xf32> to vector<8x128xf32>
    %17 = arith.negf %16 : vector<8x128xf32>
    %18 = math.exp %17 : vector<8x128xf32>
    %cst_15 = arith.constant 1.000000e+00 : f32
    %19 = vector.broadcast %cst_15 : f32 to vector<8x128xf32>
    %20 = arith.addf %19, %18 : vector<8x128xf32>
    %21 = arith.divf %19, %20 : vector<8x128xf32>
    %22 = vector.extract_strided_slice %15 {offsets = [0, 128], sizes = [8, 128], strides = [1, 1]} : vector<8x512xf32> to vector<8x128xf32>
    %23 = arith.negf %22 : vector<8x128xf32>
    %24 = math.exp %23 : vector<8x128xf32>
    %cst_16 = arith.constant 1.000000e+00 : f32
    %25 = vector.broadcast %cst_16 : f32 to vector<8x128xf32>
    %26 = arith.addf %25, %24 : vector<8x128xf32>
    %27 = arith.divf %25, %26 : vector<8x128xf32>
    %28 = vector.extract_strided_slice %15 {offsets = [0, 256], sizes = [8, 128], strides = [1, 1]} : vector<8x512xf32> to vector<8x128xf32>
    %29 = math.tanh %28 : vector<8x128xf32>
    %30 = vector.extract_strided_slice %15 {offsets = [0, 384], sizes = [8, 128], strides = [1, 1]} : vector<8x512xf32> to vector<8x128xf32>
    %31 = arith.negf %30 : vector<8x128xf32>
    %32 = math.exp %31 : vector<8x128xf32>
    %cst_17 = arith.constant 1.000000e+00 : f32
    %33 = vector.broadcast %cst_17 : f32 to vector<8x128xf32>
    %34 = arith.addf %33, %32 : vector<8x128xf32>
    %35 = arith.divf %33, %34 : vector<8x128xf32>
    %36 = arith.mulf %27, %10 : vector<8x128xf32>
    %37 = arith.mulf %21, %29 : vector<8x128xf32>
    %38 = arith.addf %36, %37 : vector<8x128xf32>
    %39 = math.tanh %38 : vector<8x128xf32>
    %40 = arith.mulf %35, %39 : vector<8x128xf32>
    %41 = arith.index_cast %c0_i32 : i32 to index
    %c0_18 = arith.constant 0 : index
    %c0_19 = arith.constant 0 : index
    %42 = vector.load %arg5[%41, %c0_18, %c0_19] : memref<8x8x128xf32, #tpu.memory_space<vmem>>, vector<1x8x128xf32>
    %43 = vector.shape_cast %42 : vector<1x8x128xf32> to vector<8x128xf32>
    %44 = vector.shape_cast %40 : vector<8x128xf32> to vector<1x8x128xf32>
    tpu.vector_store %arg5[%41, %c0_18, %c0_19], %44 {strides = array<i32>} : memref<8x8x128xf32, #tpu.memory_space<vmem>>, vector<1x8x128xf32>,
    %c1_i32 = arith.constant 1 : i32
    %45 = arith.index_cast %c1_i32 : i32 to index
    %c0_20 = arith.constant 0 : index
    %c0_21 = arith.constant 0 : index
    %46 = vector.load %arg6[%45, %c0_20, %c0_21] : memref<8x8x512xf32, #tpu.memory_space<vmem>>, vector<1x8x512xf32>
    %47 = vector.shape_cast %46 : vector<1x8x512xf32> to vector<8x512xf32>
    %cst_22 = arith.constant dense<0.000000e+00> : vector<8x512xf32>
    %48 = tpu.matmul %40, %9, %cst_22 {dimension_numbers = #tpu.dot_dimension_numbers<[1], [0], [0], [1], [0, 0, 1, 1], [], []>} : vector<8x128xf32>, vector<128x512xf32>, vector<8x512xf32> -> vector<8x512xf32>
    %49 = arith.addf %47, %48 : vector<8x512xf32>
    %50 = vector.extract_strided_slice %49 {offsets = [0, 0], sizes = [8, 128], strides = [1, 1]} : vector<8x512xf32> to vector<8x128xf32>
    %51 = arith.negf %50 : vector<8x128xf32>
    %52 = math.exp %51 : vector<8x128xf32>
    %cst_23 = arith.constant 1.000000e+00 : f32
    %53 = vector.broadcast %cst_23 : f32 to vector<8x128xf32>
    %54 = arith.addf %53, %52 : vector<8x128xf32>
    %55 = arith.divf %53, %54 : vector<8x128xf32>
    %56 = vector.extract_strided_slice %49 {offsets = [0, 128], sizes = [8, 128], strides = [1, 1]} : vector<8x512xf32> to vector<8x128xf32>
    %57 = arith.negf %56 : vector<8x128xf32>
    %58 = math.exp %57 : vector<8x128xf32>
    %cst_24 = arith.constant 1.000000e+00 : f32
    %59 = vector.broadcast %cst_24 : f32 to vector<8x128xf32>
    %60 = arith.addf %59, %58 : vector<8x128xf32>
    %61 = arith.divf %59, %60 : vector<8x128xf32>
    %62 = vector.extract_strided_slice %49 {offsets = [0, 256], sizes = [8, 128], strides = [1, 1]} : vector<8x512xf32> to vector<8x128xf32>
    %63 = math.tanh %62 : vector<8x128xf32>
    %64 = vector.extract_strided_slice %49 {offsets = [0, 384], sizes = [8, 128], strides = [1, 1]} : vector<8x512xf32> to vector<8x128xf32>
    %65 = arith.negf %64 : vector<8x128xf32>
    %66 = math.exp %65 : vector<8x128xf32>
    %cst_25 = arith.constant 1.000000e+00 : f32
    %67 = vector.broadcast %cst_25 : f32 to vector<8x128xf32>
    %68 = arith.addf %67, %66 : vector<8x128xf32>
    %69 = arith.divf %67, %68 : vector<8x128xf32>
    %70 = arith.mulf %61, %38 : vector<8x128xf32>
    %71 = arith.mulf %55, %63 : vector<8x128xf32>
    %72 = arith.addf %70, %71 : vector<8x128xf32>
    %73 = math.tanh %72 : vector<8x128xf32>
    %74 = arith.mulf %69, %73 : vector<8x128xf32>
    %75 = arith.index_cast %c1_i32 : i32 to index
    %c0_26 = arith.constant 0 : index
    %c0_27 = arith.constant 0 : index
    %76 = vector.load %arg5[%75, %c0_26, %c0_27] : memref<8x8x128xf32, #tpu.memory_space<vmem>>, vector<1x8x128xf32>
    %77 = vector.shape_cast %76 : vector<1x8x128xf32> to vector<8x128xf32>
    %78 = vector.shape_cast %74 : vector<8x128xf32> to vector<1x8x128xf32>
    tpu.vector_store %arg5[%75, %c0_26, %c0_27], %78 {strides = array<i32>} : memref<8x8x128xf32, #tpu.memory_space<vmem>>, vector<1x8x128xf32>,
    %c2_i32 = arith.constant 2 : i32
    %79 = arith.index_cast %c2_i32 : i32 to index
    %c0_28 = arith.constant 0 : index
    %c0_29 = arith.constant 0 : index
    %80 = vector.load %arg6[%79, %c0_28, %c0_29] : memref<8x8x512xf32, #tpu.memory_space<vmem>>, vector<1x8x512xf32>
    %81 = vector.shape_cast %80 : vector<1x8x512xf32> to vector<8x512xf32>
    %cst_30 = arith.constant dense<0.000000e+00> : vector<8x512xf32>
    %82 = tpu.matmul %74, %9, %cst_30 {dimension_numbers = #tpu.dot_dimension_numbers<[1], [0], [0], [1], [0, 0, 1, 1], [], []>} : vector<8x128xf32>, vector<128x512xf32>, vector<8x512xf32> -> vector<8x512xf32>
    %83 = arith.addf %81, %82 : vector<8x512xf32>
    %84 = vector.extract_strided_slice %83 {offsets = [0, 0], sizes = [8, 128], strides = [1, 1]} : vector<8x512xf32> to vector<8x128xf32>
    %85 = arith.negf %84 : vector<8x128xf32>
    %86 = math.exp %85 : vector<8x128xf32>
    %cst_31 = arith.constant 1.000000e+00 : f32
    %87 = vector.broadcast %cst_31 : f32 to vector<8x128xf32>
    %88 = arith.addf %87, %86 : vector<8x128xf32>
    %89 = arith.divf %87, %88 : vector<8x128xf32>
    %90 = vector.extract_strided_slice %83 {offsets = [0, 128], sizes = [8, 128], strides = [1, 1]} : vector<8x512xf32> to vector<8x128xf32>
    %91 = arith.negf %90 : vector<8x128xf32>
    %92 = math.exp %91 : vector<8x128xf32>
    %cst_32 = arith.constant 1.000000e+00 : f32
    %93 = vector.broadcast %cst_32 : f32 to vector<8x128xf32>
    %94 = arith.addf %93, %92 : vector<8x128xf32>
    %95 = arith.divf %93, %94 : vector<8x128xf32>
    %96 = vector.extract_strided_slice %83 {offsets = [0, 256], sizes = [8, 128], strides = [1, 1]} : vector<8x512xf32> to vector<8x128xf32>
    %97 = math.tanh %96 : vector<8x128xf32>
    %98 = vector.extract_strided_slice %83 {offsets = [0, 384], sizes = [8, 128], strides = [1, 1]} : vector<8x512xf32> to vector<8x128xf32>
    %99 = arith.negf %98 : vector<8x128xf32>
    %100 = math.exp %99 : vector<8x128xf32>
    %cst_33 = arith.constant 1.000000e+00 : f32
    %101 = vector.broadcast %cst_33 : f32 to vector<8x128xf32>
    %102 = arith.addf %101, %100 : vector<8x128xf32>
    %103 = arith.divf %101, %102 : vector<8x128xf32>
    %104 = arith.mulf %95, %72 : vector<8x128xf32>
    %105 = arith.mulf %89, %97 : vector<8x128xf32>
    %106 = arith.addf %104, %105 : vector<8x128xf32>
    %107 = math.tanh %106 : vector<8x128xf32>
    %108 = arith.mulf %103, %107 : vector<8x128xf32>
    %109 = arith.index_cast %c2_i32 : i32 to index
    %c0_34 = arith.constant 0 : index
    %c0_35 = arith.constant 0 : index
    %110 = vector.load %arg5[%109, %c0_34, %c0_35] : memref<8x8x128xf32, #tpu.memory_space<vmem>>, vector<1x8x128xf32>
    %111 = vector.shape_cast %110 : vector<1x8x128xf32> to vector<8x128xf32>
    %112 = vector.shape_cast %108 : vector<8x128xf32> to vector<1x8x128xf32>
    tpu.vector_store %arg5[%109, %c0_34, %c0_35], %112 {strides = array<i32>} : memref<8x8x128xf32, #tpu.memory_space<vmem>>, vector<1x8x128xf32>,
    %c3_i32 = arith.constant 3 : i32
    %113 = arith.index_cast %c3_i32 : i32 to index
    %c0_36 = arith.constant 0 : index
    %c0_37 = arith.constant 0 : index
    %114 = vector.load %arg6[%113, %c0_36, %c0_37] : memref<8x8x512xf32, #tpu.memory_space<vmem>>, vector<1x8x512xf32>
    %115 = vector.shape_cast %114 : vector<1x8x512xf32> to vector<8x512xf32>
    %cst_38 = arith.constant dense<0.000000e+00> : vector<8x512xf32>
    %116 = tpu.matmul %108, %9, %cst_38 {dimension_numbers = #tpu.dot_dimension_numbers<[1], [0], [0], [1], [0, 0, 1, 1], [], []>} : vector<8x128xf32>, vector<128x512xf32>, vector<8x512xf32> -> vector<8x512xf32>
    %117 = arith.addf %115, %116 : vector<8x512xf32>
    %118 = vector.extract_strided_slice %117 {offsets = [0, 0], sizes = [8, 128], strides = [1, 1]} : vector<8x512xf32> to vector<8x128xf32>
    %119 = arith.negf %118 : vector<8x128xf32>
    %120 = math.exp %119 : vector<8x128xf32>
    %cst_39 = arith.constant 1.000000e+00 : f32
    %121 = vector.broadcast %cst_39 : f32 to vector<8x128xf32>
    %122 = arith.addf %121, %120 : vector<8x128xf32>
    %123 = arith.divf %121, %122 : vector<8x128xf32>
    %124 = vector.extract_strided_slice %117 {offsets = [0, 128], sizes = [8, 128], strides = [1, 1]} : vector<8x512xf32> to vector<8x128xf32>
    %125 = arith.negf %124 : vector<8x128xf32>
    %126 = math.exp %125 : vector<8x128xf32>
    %cst_40 = arith.constant 1.000000e+00 : f32
    %127 = vector.broadcast %cst_40 : f32 to vector<8x128xf32>
    %128 = arith.addf %127, %126 : vector<8x128xf32>
    %129 = arith.divf %127, %128 : vector<8x128xf32>
    %130 = vector.extract_strided_slice %117 {offsets = [0, 256], sizes = [8, 128], strides = [1, 1]} : vector<8x512xf32> to vector<8x128xf32>
    %131 = math.tanh %130 : vector<8x128xf32>
    %132 = vector.extract_strided_slice %117 {offsets = [0, 384], sizes = [8, 128], strides = [1, 1]} : vector<8x512xf32> to vector<8x128xf32>
    %133 = arith.negf %132 : vector<8x128xf32>
    %134 = math.exp %133 : vector<8x128xf32>
    %cst_41 = arith.constant 1.000000e+00 : f32
    %135 = vector.broadcast %cst_41 : f32 to vector<8x128xf32>
    %136 = arith.addf %135, %134 : vector<8x128xf32>
    %137 = arith.divf %135, %136 : vector<8x128xf32>
    %138 = arith.mulf %129, %106 : vector<8x128xf32>
    %139 = arith.mulf %123, %131 : vector<8x128xf32>
    %140 = arith.addf %138, %139 : vector<8x128xf32>
    %141 = math.tanh %140 : vector<8x128xf32>
    %142 = arith.mulf %137, %141 : vector<8x128xf32>
    %143 = arith.index_cast %c3_i32 : i32 to index
    %c0_42 = arith.constant 0 : index
    %c0_43 = arith.constant 0 : index
    %144 = vector.load %arg5[%143, %c0_42, %c0_43] : memref<8x8x128xf32, #tpu.memory_space<vmem>>, vector<1x8x128xf32>
    %145 = vector.shape_cast %144 : vector<1x8x128xf32> to vector<8x128xf32>
    %146 = vector.shape_cast %142 : vector<8x128xf32> to vector<1x8x128xf32>
    tpu.vector_store %arg5[%143, %c0_42, %c0_43], %146 {strides = array<i32>} : memref<8x8x128xf32, #tpu.memory_space<vmem>>, vector<1x8x128xf32>,
    %c4_i32 = arith.constant 4 : i32
    %147 = arith.index_cast %c4_i32 : i32 to index
    %c0_44 = arith.constant 0 : index
    %c0_45 = arith.constant 0 : index
    %148 = vector.load %arg6[%147, %c0_44, %c0_45] : memref<8x8x512xf32, #tpu.memory_space<vmem>>, vector<1x8x512xf32>
    %149 = vector.shape_cast %148 : vector<1x8x512xf32> to vector<8x512xf32>
    %cst_46 = arith.constant dense<0.000000e+00> : vector<8x512xf32>
    %150 = tpu.matmul %142, %9, %cst_46 {dimension_numbers = #tpu.dot_dimension_numbers<[1], [0], [0], [1], [0, 0, 1, 1], [], []>} : vector<8x128xf32>, vector<128x512xf32>, vector<8x512xf32> -> vector<8x512xf32>
    %151 = arith.addf %149, %150 : vector<8x512xf32>
    %152 = vector.extract_strided_slice %151 {offsets = [0, 0], sizes = [8, 128], strides = [1, 1]} : vector<8x512xf32> to vector<8x128xf32>
    %153 = arith.negf %152 : vector<8x128xf32>
    %154 = math.exp %153 : vector<8x128xf32>
    %cst_47 = arith.constant 1.000000e+00 : f32
    %155 = vector.broadcast %cst_47 : f32 to vector<8x128xf32>
    %156 = arith.addf %155, %154 : vector<8x128xf32>
    %157 = arith.divf %155, %156 : vector<8x128xf32>
    %158 = vector.extract_strided_slice %151 {offsets = [0, 128], sizes = [8, 128], strides = [1, 1]} : vector<8x512xf32> to vector<8x128xf32>
    %159 = arith.negf %158 : vector<8x128xf32>
    %160 = math.exp %159 : vector<8x128xf32>
    %cst_48 = arith.constant 1.000000e+00 : f32
    %161 = vector.broadcast %cst_48 : f32 to vector<8x128xf32>
    %162 = arith.addf %161, %160 : vector<8x128xf32>
    %163 = arith.divf %161, %162 : vector<8x128xf32>
    %164 = vector.extract_strided_slice %151 {offsets = [0, 256], sizes = [8, 128], strides = [1, 1]} : vector<8x512xf32> to vector<8x128xf32>
    %165 = math.tanh %164 : vector<8x128xf32>
    %166 = vector.extract_strided_slice %151 {offsets = [0, 384], sizes = [8, 128], strides = [1, 1]} : vector<8x512xf32> to vector<8x128xf32>
    %167 = arith.negf %166 : vector<8x128xf32>
    %168 = math.exp %167 : vector<8x128xf32>
    %cst_49 = arith.constant 1.000000e+00 : f32
    %169 = vector.broadcast %cst_49 : f32 to vector<8x128xf32>
    %170 = arith.addf %169, %168 : vector<8x128xf32>
    %171 = arith.divf %169, %170 : vector<8x128xf32>
    %172 = arith.mulf %163, %140 : vector<8x128xf32>
    %173 = arith.mulf %157, %165 : vector<8x128xf32>
    %174 = arith.addf %172, %173 : vector<8x128xf32>
    %175 = math.tanh %174 : vector<8x128xf32>
    %176 = arith.mulf %171, %175 : vector<8x128xf32>
    %177 = arith.index_cast %c4_i32 : i32 to index
    %c0_50 = arith.constant 0 : index
    %c0_51 = arith.constant 0 : index
    %178 = vector.load %arg5[%177, %c0_50, %c0_51] : memref<8x8x128xf32, #tpu.memory_space<vmem>>, vector<1x8x128xf32>
    %179 = vector.shape_cast %178 : vector<1x8x128xf32> to vector<8x128xf32>
    %180 = vector.shape_cast %176 : vector<8x128xf32> to vector<1x8x128xf32>
    tpu.vector_store %arg5[%177, %c0_50, %c0_51], %180 {strides = array<i32>} : memref<8x8x128xf32, #tpu.memory_space<vmem>>, vector<1x8x128xf32>,
    %c5_i32 = arith.constant 5 : i32
    %181 = arith.index_cast %c5_i32 : i32 to index
    %c0_52 = arith.constant 0 : index
    %c0_53 = arith.constant 0 : index
    %182 = vector.load %arg6[%181, %c0_52, %c0_53] : memref<8x8x512xf32, #tpu.memory_space<vmem>>, vector<1x8x512xf32>
    %183 = vector.shape_cast %182 : vector<1x8x512xf32> to vector<8x512xf32>
    %cst_54 = arith.constant dense<0.000000e+00> : vector<8x512xf32>
    %184 = tpu.matmul %176, %9, %cst_54 {dimension_numbers = #tpu.dot_dimension_numbers<[1], [0], [0], [1], [0, 0, 1, 1], [], []>} : vector<8x128xf32>, vector<128x512xf32>, vector<8x512xf32> -> vector<8x512xf32>
    %185 = arith.addf %183, %184 : vector<8x512xf32>
    %186 = vector.extract_strided_slice %185 {offsets = [0, 0], sizes = [8, 128], strides = [1, 1]} : vector<8x512xf32> to vector<8x128xf32>
    %187 = arith.negf %186 : vector<8x128xf32>
    %188 = math.exp %187 : vector<8x128xf32>
    %cst_55 = arith.constant 1.000000e+00 : f32
    %189 = vector.broadcast %cst_55 : f32 to vector<8x128xf32>
    %190 = arith.addf %189, %188 : vector<8x128xf32>
    %191 = arith.divf %189, %190 : vector<8x128xf32>
    %192 = vector.extract_strided_slice %185 {offsets = [0, 128], sizes = [8, 128], strides = [1, 1]} : vector<8x512xf32> to vector<8x128xf32>
    %193 = arith.negf %192 : vector<8x128xf32>
    %194 = math.exp %193 : vector<8x128xf32>
    %cst_56 = arith.constant 1.000000e+00 : f32
    %195 = vector.broadcast %cst_56 : f32 to vector<8x128xf32>
    %196 = arith.addf %195, %194 : vector<8x128xf32>
    %197 = arith.divf %195, %196 : vector<8x128xf32>
    %198 = vector.extract_strided_slice %185 {offsets = [0, 256], sizes = [8, 128], strides = [1, 1]} : vector<8x512xf32> to vector<8x128xf32>
    %199 = math.tanh %198 : vector<8x128xf32>
    %200 = vector.extract_strided_slice %185 {offsets = [0, 384], sizes = [8, 128], strides = [1, 1]} : vector<8x512xf32> to vector<8x128xf32>
    %201 = arith.negf %200 : vector<8x128xf32>
    %202 = math.exp %201 : vector<8x128xf32>
    %cst_57 = arith.constant 1.000000e+00 : f32
    %203 = vector.broadcast %cst_57 : f32 to vector<8x128xf32>
    %204 = arith.addf %203, %202 : vector<8x128xf32>
    %205 = arith.divf %203, %204 : vector<8x128xf32>
    %206 = arith.mulf %197, %174 : vector<8x128xf32>
    %207 = arith.mulf %191, %199 : vector<8x128xf32>
    %208 = arith.addf %206, %207 : vector<8x128xf32>
    %209 = math.tanh %208 : vector<8x128xf32>
    %210 = arith.mulf %205, %209 : vector<8x128xf32>
    %211 = arith.index_cast %c5_i32 : i32 to index
    %c0_58 = arith.constant 0 : index
    %c0_59 = arith.constant 0 : index
    %212 = vector.load %arg5[%211, %c0_58, %c0_59] : memref<8x8x128xf32, #tpu.memory_space<vmem>>, vector<1x8x128xf32>
    %213 = vector.shape_cast %212 : vector<1x8x128xf32> to vector<8x128xf32>
    %214 = vector.shape_cast %210 : vector<8x128xf32> to vector<1x8x128xf32>
    tpu.vector_store %arg5[%211, %c0_58, %c0_59], %214 {strides = array<i32>} : memref<8x8x128xf32, #tpu.memory_space<vmem>>, vector<1x8x128xf32>,
    %c6_i32 = arith.constant 6 : i32
    %215 = arith.index_cast %c6_i32 : i32 to index
    %c0_60 = arith.constant 0 : index
    %c0_61 = arith.constant 0 : index
    %216 = vector.load %arg6[%215, %c0_60, %c0_61] : memref<8x8x512xf32, #tpu.memory_space<vmem>>, vector<1x8x512xf32>
    %217 = vector.shape_cast %216 : vector<1x8x512xf32> to vector<8x512xf32>
    %cst_62 = arith.constant dense<0.000000e+00> : vector<8x512xf32>
    %218 = tpu.matmul %210, %9, %cst_62 {dimension_numbers = #tpu.dot_dimension_numbers<[1], [0], [0], [1], [0, 0, 1, 1], [], []>} : vector<8x128xf32>, vector<128x512xf32>, vector<8x512xf32> -> vector<8x512xf32>
    %219 = arith.addf %217, %218 : vector<8x512xf32>
    %220 = vector.extract_strided_slice %219 {offsets = [0, 0], sizes = [8, 128], strides = [1, 1]} : vector<8x512xf32> to vector<8x128xf32>
    %221 = arith.negf %220 : vector<8x128xf32>
    %222 = math.exp %221 : vector<8x128xf32>
    %cst_63 = arith.constant 1.000000e+00 : f32
    %223 = vector.broadcast %cst_63 : f32 to vector<8x128xf32>
    %224 = arith.addf %223, %222 : vector<8x128xf32>
    %225 = arith.divf %223, %224 : vector<8x128xf32>
    %226 = vector.extract_strided_slice %219 {offsets = [0, 128], sizes = [8, 128], strides = [1, 1]} : vector<8x512xf32> to vector<8x128xf32>
    %227 = arith.negf %226 : vector<8x128xf32>
    %228 = math.exp %227 : vector<8x128xf32>
    %cst_64 = arith.constant 1.000000e+00 : f32
    %229 = vector.broadcast %cst_64 : f32 to vector<8x128xf32>
    %230 = arith.addf %229, %228 : vector<8x128xf32>
    %231 = arith.divf %229, %230 : vector<8x128xf32>
    %232 = vector.extract_strided_slice %219 {offsets = [0, 256], sizes = [8, 128], strides = [1, 1]} : vector<8x512xf32> to vector<8x128xf32>
    %233 = math.tanh %232 : vector<8x128xf32>
    %234 = vector.extract_strided_slice %219 {offsets = [0, 384], sizes = [8, 128], strides = [1, 1]} : vector<8x512xf32> to vector<8x128xf32>
    %235 = arith.negf %234 : vector<8x128xf32>
    %236 = math.exp %235 : vector<8x128xf32>
    %cst_65 = arith.constant 1.000000e+00 : f32
    %237 = vector.broadcast %cst_65 : f32 to vector<8x128xf32>
    %238 = arith.addf %237, %236 : vector<8x128xf32>
    %239 = arith.divf %237, %238 : vector<8x128xf32>
    %240 = arith.mulf %231, %208 : vector<8x128xf32>
    %241 = arith.mulf %225, %233 : vector<8x128xf32>
    %242 = arith.addf %240, %241 : vector<8x128xf32>
    %243 = math.tanh %242 : vector<8x128xf32>
    %244 = arith.mulf %239, %243 : vector<8x128xf32>
    %245 = arith.index_cast %c6_i32 : i32 to index
    %c0_66 = arith.constant 0 : index
    %c0_67 = arith.constant 0 : index
    %246 = vector.load %arg5[%245, %c0_66, %c0_67] : memref<8x8x128xf32, #tpu.memory_space<vmem>>, vector<1x8x128xf32>
    %247 = vector.shape_cast %246 : vector<1x8x128xf32> to vector<8x128xf32>
    %248 = vector.shape_cast %244 : vector<8x128xf32> to vector<1x8x128xf32>
    tpu.vector_store %arg5[%245, %c0_66, %c0_67], %248 {strides = array<i32>} : memref<8x8x128xf32, #tpu.memory_space<vmem>>, vector<1x8x128xf32>,
    %c7_i32 = arith.constant 7 : i32
    %249 = arith.index_cast %c7_i32 : i32 to index
    %c0_68 = arith.constant 0 : index
    %c0_69 = arith.constant 0 : index
    %250 = vector.load %arg6[%249, %c0_68, %c0_69] : memref<8x8x512xf32, #tpu.memory_space<vmem>>, vector<1x8x512xf32>
    %251 = vector.shape_cast %250 : vector<1x8x512xf32> to vector<8x512xf32>
    %cst_70 = arith.constant dense<0.000000e+00> : vector<8x512xf32>
    %252 = tpu.matmul %244, %9, %cst_70 {dimension_numbers = #tpu.dot_dimension_numbers<[1], [0], [0], [1], [0, 0, 1, 1], [], []>} : vector<8x128xf32>, vector<128x512xf32>, vector<8x512xf32> -> vector<8x512xf32>
    %253 = arith.addf %251, %252 : vector<8x512xf32>
    %254 = vector.extract_strided_slice %253 {offsets = [0, 0], sizes = [8, 128], strides = [1, 1]} : vector<8x512xf32> to vector<8x128xf32>
    %255 = arith.negf %254 : vector<8x128xf32>
    %256 = math.exp %255 : vector<8x128xf32>
    %cst_71 = arith.constant 1.000000e+00 : f32
    %257 = vector.broadcast %cst_71 : f32 to vector<8x128xf32>
    %258 = arith.addf %257, %256 : vector<8x128xf32>
    %259 = arith.divf %257, %258 : vector<8x128xf32>
    %260 = vector.extract_strided_slice %253 {offsets = [0, 128], sizes = [8, 128], strides = [1, 1]} : vector<8x512xf32> to vector<8x128xf32>
    %261 = arith.negf %260 : vector<8x128xf32>
    %262 = math.exp %261 : vector<8x128xf32>
    %cst_72 = arith.constant 1.000000e+00 : f32
    %263 = vector.broadcast %cst_72 : f32 to vector<8x128xf32>
    %264 = arith.addf %263, %262 : vector<8x128xf32>
    %265 = arith.divf %263, %264 : vector<8x128xf32>
    %266 = vector.extract_strided_slice %253 {offsets = [0, 256], sizes = [8, 128], strides = [1, 1]} : vector<8x512xf32> to vector<8x128xf32>
    %267 = math.tanh %266 : vector<8x128xf32>
    %268 = vector.extract_strided_slice %253 {offsets = [0, 384], sizes = [8, 128], strides = [1, 1]} : vector<8x512xf32> to vector<8x128xf32>
    %269 = arith.negf %268 : vector<8x128xf32>
    %270 = math.exp %269 : vector<8x128xf32>
    %cst_73 = arith.constant 1.000000e+00 : f32
    %271 = vector.broadcast %cst_73 : f32 to vector<8x128xf32>
    %272 = arith.addf %271, %270 : vector<8x128xf32>
    %273 = arith.divf %271, %272 : vector<8x128xf32>
    %274 = arith.mulf %265, %242 : vector<8x128xf32>
    %275 = arith.mulf %259, %267 : vector<8x128xf32>
    %276 = arith.addf %274, %275 : vector<8x128xf32>
    %277 = math.tanh %276 : vector<8x128xf32>
    %278 = arith.mulf %273, %277 : vector<8x128xf32>
    %279 = arith.index_cast %c7_i32 : i32 to index
    %c0_74 = arith.constant 0 : index
    %c0_75 = arith.constant 0 : index
    %280 = vector.load %arg5[%279, %c0_74, %c0_75] : memref<8x8x128xf32, #tpu.memory_space<vmem>>, vector<1x8x128xf32>
    %281 = vector.shape_cast %280 : vector<1x8x128xf32> to vector<8x128xf32>
    %282 = vector.shape_cast %278 : vector<8x128xf32> to vector<1x8x128xf32>
    tpu.vector_store %arg5[%279, %c0_74, %c0_75], %282 {strides = array<i32>} : memref<8x8x128xf32, #tpu.memory_space<vmem>>, vector<1x8x128xf32>,
    %c8_i32 = arith.constant 8 : i32
    return
  }
  func.func @transform_0(%arg0: i32) -> (i32, i32, i32) {
    %c0_i32 = arith.constant 0 : i32
    %c0_i32_0 = arith.constant 0 : i32
    %c0_i32_1 = arith.constant 0 : i32
    %c0_i32_2 = arith.constant 0 : i32
    return %c0_i32, %c0_i32_0, %c0_i32_1 : i32, i32, i32
  }
  func.func @transform_1(%arg0: i32) -> (i32, i32) {
    %c0_i32 = arith.constant 0 : i32
    %c0_i32_0 = arith.constant 0 : i32
    %c0_i32_1 = arith.constant 0 : i32
    return %c0_i32, %c0_i32_0 : i32, i32
  }
  func.func @transform_2(%arg0: i32) -> (i32, i32) {
    %c0_i32 = arith.constant 0 : i32
    %c0_i32_0 = arith.constant 0 : i32
    %c0_i32_1 = arith.constant 0 : i32
    return %c0_i32, %c0_i32_0 : i32, i32
  }
  func.func @transform_3(%arg0: i32) -> (i32, i32) {
    %c0_i32 = arith.constant 0 : i32
    %c0_i32_0 = arith.constant 0 : i32
    %c0_i32_1 = arith.constant 0 : i32
    return %c0_i32, %c0_i32_0 : i32, i32
  }
  func.func @transform_4(%arg0: i32) -> (i32, i32, i32) {
    %c0_i32 = arith.constant 0 : i32
    %c0_i32_0 = arith.constant 0 : i32
    %c0_i32_1 = arith.constant 0 : i32
    %c0_i32_2 = arith.constant 0 : i32
    return %c0_i32, %c0_i32_0, %c0_i32_1 : i32, i32, i32
  }
}

</mosaic_0001>

<llo_original>
// kernel: tpu_custom_call.1
$region0: #{tpu_custom_call.1}
  #allocation0 [shape = 'u32[]', space=smem, size = 0x4, offset = 0x4, fixed_abs, tag = 'smem constant byte address 0x4 - core index']
  #allocation1 [shape = 'u32[72,128]{1,0:T(1,128)}', space=vmem, size = 0x9000, scoped, tag = 'internal scratch']
  #allocation2 [shape = 'f32[8,8,512]{2,1,0:T(8,128)}', space=vmem, size = 0x20000, scoped, tag = 'scratch operand']
  %s0 = inlined_call_operand.hbm [shape: f32[8,8,128], index: 0, kind: input, shape index: {}]
  %s1 = inlined_call_operand.hbm [shape: f32[128,512], index: 1, kind: input, shape index: {}]
  %s2 = inlined_call_operand.hbm [shape: f32[128,512], index: 2, kind: input, shape index: {}]
  %s3 = inlined_call_operand.hbm [shape: f32[1,512], index: 3, kind: input, shape index: {}]
  %s4 = inlined_call_operand.hbm [shape: f32[8,8,128], index: 4, kind: output, shape index: {}]
  %s5 = sld [smem:[#allocation0]]
  $region42: #{tpu_custom_call.1} parent=0
    _
  %s7 = ssub.s32 1, %s5
  %s8 = scalar_select 0, %s7, %s5
  $region1: #{tpu_custom_call.1} parent=0
    #allocation3 [shape = 'u8[32768]{0}', space=vmem, size = 0x8000, scoped, tag = 'input window, operand 0, single buffered']
    #allocation4 [shape = 's32[1]{0}', space=sflag, size = 0x4, scoped, tag = 'scoped memory for tpu_custom_call.1']
    #allocation5 [shape = 's32[1]{0}', space=sflag, size = 0x4, scoped, tag = 'scoped memory for tpu_custom_call.1']
    #allocation6 [shape = 'u8[262144]{0}', space=vmem, size = 0x40000, scoped, tag = 'input window, operand 1, single buffered']
    #allocation7 [shape = 's32[1]{0}', space=sflag, size = 0x4, scoped, tag = 'scoped memory for tpu_custom_call.1']
    #allocation8 [shape = 'u8[262144]{0}', space=vmem, size = 0x40000, scoped, tag = 'input window, operand 2, single buffered']
    #allocation9 [shape = 'u8[2048]{0}', space=vmem, size = 0x800, scoped, tag = 'input window, operand 3, single buffered']
    #allocation10 [shape = 's32[1]{0}', space=sflag, size = 0x4, scoped, tag = 'scoped memory for tpu_custom_call.1']
    #allocation11 [shape = 'u8[32768]{0}', space=vmem, size = 0x8000, scoped, tag = 'output window, operand 0, single buffered']
    %9 = vsyncpa [#allocation4], 0
    %10 = vsyncpa [#allocation7], 0
    %11 = vsyncpa [#allocation10], 0
    %12 = vsyncpa [#allocation5], 0
    // Predicated region
    $region2: #{tpu_custom_call.1} parent=1 // pred_check
      _
    $region3: #{tpu_custom_call.1} parent=1 // pred_check_branch
      %14 = sbr.rel (0) target = $region5
    $region4: #{tpu_custom_call.1} parent=1 // pred_region
      %16 = vsyncadd [#allocation4], 0
      %s17 = sshll.u32 %s0, 4
      %s18 = int_to_ptr.hbm [resolvable:$true] %s17
      %s19 = sshll.u32 [#allocation3], 4
      %s20 = int_to_ptr.vmem [resolvable:$true] %s19
      %25 = dma.hbm_to_vmem [thread:$0]  %s18, 1024, %s20, [#allocation4], 128, 128, 8
    $region5: #{tpu_custom_call.1} parent=1 // pred_fallthru
      _
    // Predicated region
    $region6: #{tpu_custom_call.1} parent=1 // pred_check
      _
    $region7: #{tpu_custom_call.1} parent=1 // pred_check_branch
      %27 = sbr.rel (0) target = $region9
    $region8: #{tpu_custom_call.1} parent=1 // pred_region
      %29 = vsyncadd [#allocation7], 0
      %s30 = sshll.u32 %s1, 4
      %s31 = int_to_ptr.hbm [resolvable:$true] %s30
      %s32 = sshll.u32 [#allocation6], 4
      %s33 = int_to_ptr.vmem [resolvable:$true] %s32
      %38 = dma.hbm_to_vmem [thread:$0]  %s31, 8192, %s33, [#allocation7], 512, 512, 32
    $region9: #{tpu_custom_call.1} parent=1 // pred_fallthru
      _
    // Predicated region
    $region10: #{tpu_custom_call.1} parent=1 // pred_check
      _
    $region11: #{tpu_custom_call.1} parent=1 // pred_check_branch
      %40 = sbr.rel (0) target = $region13
    $region12: #{tpu_custom_call.1} parent=1 // pred_region
      %42 = vsyncadd [#allocation7], 0
      %s43 = sshll.u32 %s2, 4
      %s44 = int_to_ptr.hbm [resolvable:$true] %s43
      %s45 = sshll.u32 [#allocation8], 4
      %s46 = int_to_ptr.vmem [resolvable:$true] %s45
      %51 = dma.hbm_to_vmem [thread:$0]  %s44, 8192, %s46, [#allocation7], 512, 512, 32
    $region13: #{tpu_custom_call.1} parent=1 // pred_fallthru
      _
    // Predicated region
    $region14: #{tpu_custom_call.1} parent=1 // pred_check
      _
    $region15: #{tpu_custom_call.1} parent=1 // pred_check_branch
      %53 = sbr.rel (0) target = $region17
    $region16: #{tpu_custom_call.1} parent=1 // pred_region
      %55 = vsyncadd [#allocation10], 0
      %s57 = sshll.u32 %s3, 4
      %s58 = int_to_ptr.hbm [resolvable:$true] %s57
      %s59 = sshll.u32 [#allocation9], 4
      %s60 = int_to_ptr.vmem [resolvable:$true] %s59
      %62 = dma.hbm_to_vmem [thread:$0]  %s58, 64, %s60, [#allocation10]
    $region17: #{tpu_custom_call.1} parent=1 // pred_fallthru
      _
    // Predicated region
    $region18: #{tpu_custom_call.1} parent=1 // pred_check
      _
    $region19: #{tpu_custom_call.1} parent=1 // pred_check_branch
      %64 = sbr.rel (0) target = $region21
    $region20: #{tpu_custom_call.1} parent=1 // pred_region
      %66 = dma.done [#allocation4], 1024
    $region21: #{tpu_custom_call.1} parent=1 // pred_fallthru
      _
    // Predicated region
    $region22: #{tpu_custom_call.1} parent=1 // pred_check
      _
    $region23: #{tpu_custom_call.1} parent=1 // pred_check_branch
      %68 = sbr.rel (0) target = $region25
    $region24: #{tpu_custom_call.1} parent=1 // pred_region
      %70 = dma.done [#allocation7], 8192
    $region25: #{tpu_custom_call.1} parent=1 // pred_fallthru
      _
    // Predicated region
    $region26: #{tpu_custom_call.1} parent=1 // pred_check
      _
    $region27: #{tpu_custom_call.1} parent=1 // pred_check_branch
      %72 = sbr.rel (0) target = $region29
    $region28: #{tpu_custom_call.1} parent=1 // pred_region
      %74 = dma.done [#allocation7], 8192
    $region29: #{tpu_custom_call.1} parent=1 // pred_fallthru
      _
    // Predicated region
    $region30: #{tpu_custom_call.1} parent=1 // pred_check
      _
    $region31: #{tpu_custom_call.1} parent=1 // pred_check_branch
      %76 = sbr.rel (0) target = $region33
    $region32: #{tpu_custom_call.1} parent=1 // pred_region
      %78 = dma.done [#allocation10], 64
    $region33: #{tpu_custom_call.1} parent=1 // pred_fallthru
      _
    %v79 = vld [vmem:[#allocation3] sm:$0xff]
    %v80 = vld [vmem:[#allocation3 + $0x8] sm:$0xff]
    %v81 = vld [vmem:[#allocation3 + $0x10] sm:$0xff]
    %v82 = vld [vmem:[#allocation3 + $0x18] sm:$0xff]
    %v83 = vld [vmem:[#allocation3 + $0x20] sm:$0xff]
    %v84 = vld [vmem:[#allocation3 + $0x28] sm:$0xff]
    %v85 = vld [vmem:[#allocation3 + $0x30] sm:$0xff]
    %v86 = vld [vmem:[#allocation3 + $0x38] sm:$0xff]
    %v87 = vld [vmem:[#allocation6] sm:$0xff]
    %v88 = vld [vmem:[#allocation6 + $0x8] sm:$0xff]
    %v89 = vld [vmem:[#allocation6 + $0x10] sm:$0xff]
    %v90 = vld [vmem:[#allocation6 + $0x18] sm:$0xff]
    %v91 = vld [vmem:[#allocation6 + $0x20] sm:$0xff]
    %v92 = vld [vmem:[#allocation6 + $0x28] sm:$0xff]
    %v93 = vld [vmem:[#allocation6 + $0x30] sm:$0xff]
    %v94 = vld [vmem:[#allocation6 + $0x38] sm:$0xff]
    %v95 = vld [vmem:[#allocation6 + $0x40] sm:$0xff]
    %v96 = vld [vmem:[#allocation6 + $0x48] sm:$0xff]
    %v97 = vld [vmem:[#allocation6 + $0x50] sm:$0xff]
    %v98 = vld [vmem:[#allocation6 + $0x58] sm:$0xff]
    %v99 = vld [vmem:[#allocation6 + $0x60] sm:$0xff]
    %v100 = vld [vmem:[#allocation6 + $0x68] sm:$0xff]
    %v101 = vld [vmem:[#allocation6 + $0x70] sm:$0xff]
    %v102 = vld [vmem:[#allocation6 + $0x78] sm:$0xff]
    %v103 = vld [vmem:[#allocation6 + $0x80] sm:$0xff]
    %v104 = vld [vmem:[#allocation6 + $0x88] sm:$0xff]
    %v105 = vld [vmem:[#allocation6 + $0x90] sm:$0xff]
    %v106 = vld [vmem:[#allocation6 + $0x98] sm:$0xff]
    %v107 = vld [vmem:[#allocation6 + $0xa0] sm:$0xff]
    %v108 = vld [vmem:[#allocation6 + $0xa8] sm:$0xff]
    %v109 = vld [vmem:[#allocation6 + $0xb0] sm:$0xff]
    %v110 = vld [vmem:[#allocation6 + $0xb8] sm:$0xff]
    %v111 = vld [vmem:[#allocation6 + $0xc0] sm:$0xff]
    %v112 = vld [vmem:[#allocation6 + $0xc8] sm:$0xff]
    %v113 = vld [vmem:[#allocation6 + $0xd0] sm:$0xff]
    %v114 = vld [vmem:[#allocation6 + $0xd8] sm:$0xff]
    %v115 = vld [vmem:[#allocation6 + $0xe0] sm:$0xff]
    %v116 = vld [vmem:[#allocation6 + $0xe8] sm:$0xff]
    %v117 = vld [vmem:[#allocation6 + $0xf0] sm:$0xff]
    %v118 = vld [vmem:[#allocation6 + $0xf8] sm:$0xff]
    %v119 = vld [vmem:[#allocation6 + $0x100] sm:$0xff]
    %v120 = vld [vmem:[#allocation6 + $0x108] sm:$0xff]
    %v121 = vld [vmem:[#allocation6 + $0x110] sm:$0xff]
    %v122 = vld [vmem:[#allocation6 + $0x118] sm:$0xff]
    %v123 = vld [vmem:[#allocation6 + $0x120] sm:$0xff]
    %v124 = vld [vmem:[#allocation6 + $0x128] sm:$0xff]
    %v125 = vld [vmem:[#allocation6 + $0x130] sm:$0xff]
    %v126 = vld [vmem:[#allocation6 + $0x138] sm:$0xff]
    %v127 = vld [vmem:[#allocation6 + $0x140] sm:$0xff]
    %v128 = vld [vmem:[#allocation6 + $0x148] sm:$0xff]
    %v129 = vld [vmem:[#allocation6 + $0x150] sm:$0xff]
    %v130 = vld [vmem:[#allocation6 + $0x158] sm:$0xff]
    %v131 = vld [vmem:[#allocation6 + $0x160] sm:$0xff]
    %v132 = vld [vmem:[#allocation6 + $0x168] sm:$0xff]
    %v133 = vld [vmem:[#allocation6 + $0x170] sm:$0xff]
    %v134 = vld [vmem:[#allocation6 + $0x178] sm:$0xff]
    %v135 = vld [vmem:[#allocation6 + $0x180] sm:$0xff]
    %v136 = vld [vmem:[#allocation6 + $0x188] sm:$0xff]
    %v137 = vld [vmem:[#allocation6 + $0x190] sm:$0xff]
    %v138 = vld [vmem:[#allocation6 + $0x198] sm:$0xff]
    %v139 = vld [vmem:[#allocation6 + $0x1a0] sm:$0xff]
    %v140 = vld [vmem:[#allocation6 + $0x1a8] sm:$0xff]
    %v141 = vld [vmem:[#allocation6 + $0x1b0] sm:$0xff]
    %v142 = vld [vmem:[#allocation6 + $0x1b8] sm:$0xff]
    %v143 = vld [vmem:[#allocation6 + $0x1c0] sm:$0xff]
    %v144 = vld [vmem:[#allocation6 + $0x1c8] sm:$0xff]
    %v145 = vld [vmem:[#allocation6 + $0x1d0] sm:$0xff]
    %v146 = vld [vmem:[#allocation6 + $0x1d8] sm:$0xff]
    %v147 = vld [vmem:[#allocation6 + $0x1e0] sm:$0xff]
    %v148 = vld [vmem:[#allocation6 + $0x1e8] sm:$0xff]
    %v149 = vld [vmem:[#allocation6 + $0x1f0] sm:$0xff]
    %v150 = vld [vmem:[#allocation6 + $0x1f8] sm:$0xff]
    %v151 = vld [vmem:[#allocation9] sm:$0xf]
    %v153 = vperm.slane %v151, 0
    %v154 = vperm.slane %v151, 1
    %v155 = vperm.slane %v151, 2
    %v156 = vperm.slane %v151, 3
    %161 = vmatpush.msra.mxu0 %v147
    %162 = vmatpush.msra.mxu0 %v143
    %163 = vmatpush.msra.mxu0 %v139
    %164 = vmatpush.msra.mxu0 %v135
    %165 = vmatpush.msra.mxu0 %v131
    %166 = vmatpush.msra.mxu0 %v127
    %167 = vmatpush.msra.mxu0 %v123
    %168 = vmatpush.msra.mxu0 %v119
    %169 = vmatpush.msra.mxu0 %v115
    %170 = vmatpush.msra.mxu0 %v111
    %171 = vmatpush.msra.mxu0 %v107
    %172 = vmatpush.msra.mxu0 %v103
    %173 = vmatpush.msra.mxu0 %v99
    %174 = vmatpush.msra.mxu0 %v95
    %175 = vmatpush.msra.mxu0 %v91
    %176 = vmatpush.msra.mxu0 %v87
    %177 = vmatmul.f32.gmra.mxu0 %v79
    %v178 = vpop.f32.mrf.mxu0
    %v179 = vadd.f32 %v153, %v178
    %180 = vmatmul.f32.gmra.mxu0 %v80
    %v181 = vpop.f32.mrf.mxu0
    %v182 = vadd.f32 %v153, %v181
    %183 = vmatmul.f32.gmra.mxu0 %v81
    %v184 = vpop.f32.mrf.mxu0
    %v185 = vadd.f32 %v153, %v184
    %186 = vmatmul.f32.gmra.mxu0 %v82
    %v187 = vpop.f32.mrf.mxu0
    %v188 = vadd.f32 %v153, %v187
    %189 = vmatmul.f32.gmra.mxu0 %v83
    %v190 = vpop.f32.mrf.mxu0
    %v191 = vadd.f32 %v153, %v190
    %192 = vmatmul.f32.gmra.mxu0 %v84
    %v193 = vpop.f32.mrf.mxu0
    %v194 = vadd.f32 %v153, %v193
    %195 = vmatmul.f32.gmra.mxu0 %v85
    %v196 = vpop.f32.mrf.mxu0
    %v197 = vadd.f32 %v153, %v196
    %198 = vmatmul.f32.gmra.mxu0 %v86
    %v199 = vpop.f32.mrf.mxu0
    %v200 = vadd.f32 %v153, %v199
    %201 = vdwg.mxu0
    %202 = vmatpush.msra.mxu0 %v148
    %203 = vmatpush.msra.mxu0 %v144
    %204 = vmatpush.msra.mxu0 %v140
    %205 = vmatpush.msra.mxu0 %v136
    %206 = vmatpush.msra.mxu0 %v132
    %207 = vmatpush.msra.mxu0 %v128
    %208 = vmatpush.msra.mxu0 %v124
    %209 = vmatpush.msra.mxu0 %v120
    %210 = vmatpush.msra.mxu0 %v116
    %211 = vmatpush.msra.mxu0 %v112
    %212 = vmatpush.msra.mxu0 %v108
    %213 = vmatpush.msra.mxu0 %v104
    %214 = vmatpush.msra.mxu0 %v100
    %215 = vmatpush.msra.mxu0 %v96
    %216 = vmatpush.msra.mxu0 %v92
    %217 = vmatpush.msra.mxu0 %v88
    %218 = vmatmul.f32.gmra.mxu0 %v79
    %v219 = vpop.f32.mrf.mxu0
    %v220 = vadd.f32 %v154, %v219
    %221 = vmatmul.f32.gmra.mxu0 %v80
    %v222 = vpop.f32.mrf.mxu0
    %v223 = vadd.f32 %v154, %v222
    %224 = vmatmul.f32.gmra.mxu0 %v81
    %v225 = vpop.f32.mrf.mxu0
    %v226 = vadd.f32 %v154, %v225
    %227 = vmatmul.f32.gmra.mxu0 %v82
    %v228 = vpop.f32.mrf.mxu0
    %v229 = vadd.f32 %v154, %v228
    %230 = vmatmul.f32.gmra.mxu0 %v83
    %v231 = vpop.f32.mrf.mxu0
    %v232 = vadd.f32 %v154, %v231
    %233 = vmatmul.f32.gmra.mxu0 %v84
    %v234 = vpop.f32.mrf.mxu0
    %v235 = vadd.f32 %v154, %v234
    %236 = vmatmul.f32.gmra.mxu0 %v85
    %v237 = vpop.f32.mrf.mxu0
    %v238 = vadd.f32 %v154, %v237
    %239 = vmatmul.f32.gmra.mxu0 %v86
    %v240 = vpop.f32.mrf.mxu0
    %v241 = vadd.f32 %v154, %v240
    %242 = vdwg.mxu0
    %243 = vmatpush.msra.mxu0 %v149
    %244 = vmatpush.msra.mxu0 %v145
    %245 = vmatpush.msra.mxu0 %v141
    %246 = vmatpush.msra.mxu0 %v137
    %247 = vmatpush.msra.mxu0 %v133
    %248 = vmatpush.msra.mxu0 %v129
    %249 = vmatpush.msra.mxu0 %v125
    %250 = vmatpush.msra.mxu0 %v121
    %251 = vmatpush.msra.mxu0 %v117
    %252 = vmatpush.msra.mxu0 %v113
    %253 = vmatpush.msra.mxu0 %v109
    %254 = vmatpush.msra.mxu0 %v105
    %255 = vmatpush.msra.mxu0 %v101
    %256 = vmatpush.msra.mxu0 %v97
    %257 = vmatpush.msra.mxu0 %v93
    %258 = vmatpush.msra.mxu0 %v89
    %259 = vmatmul.f32.gmra.mxu0 %v79
    %v260 = vpop.f32.mrf.mxu0
    %v261 = vadd.f32 %v155, %v260
    %262 = vmatmul.f32.gmra.mxu0 %v80
    %v263 = vpop.f32.mrf.mxu0
    %v264 = vadd.f32 %v155, %v263
    %265 = vmatmul.f32.gmra.mxu0 %v81
    %v266 = vpop.f32.mrf.mxu0
    %v267 = vadd.f32 %v155, %v266
    %268 = vmatmul.f32.gmra.mxu0 %v82
    %v269 = vpop.f32.mrf.mxu0
    %v270 = vadd.f32 %v155, %v269
    %271 = vmatmul.f32.gmra.mxu0 %v83
    %v272 = vpop.f32.mrf.mxu0
    %v273 = vadd.f32 %v155, %v272
    %274 = vmatmul.f32.gmra.mxu0 %v84
    %v275 = vpop.f32.mrf.mxu0
    %v276 = vadd.f32 %v155, %v275
    %277 = vmatmul.f32.gmra.mxu0 %v85
    %v278 = vpop.f32.mrf.mxu0
    %v279 = vadd.f32 %v155, %v278
    %280 = vmatmul.f32.gmra.mxu0 %v86
    %v281 = vpop.f32.mrf.mxu0
    %v282 = vadd.f32 %v155, %v281
    %283 = vdwg.mxu0
    %284 = vmatpush.msra.mxu0 %v150
    %285 = vmatpush.msra.mxu0 %v146
    %286 = vmatpush.msra.mxu0 %v142
    %287 = vmatpush.msra.mxu0 %v138
    %288 = vmatpush.msra.mxu0 %v134
    %289 = vmatpush.msra.mxu0 %v130
    %290 = vmatpush.msra.mxu0 %v126
    %291 = vmatpush.msra.mxu0 %v122
    %292 = vmatpush.msra.mxu0 %v118
    %293 = vmatpush.msra.mxu0 %v114
    %294 = vmatpush.msra.mxu0 %v110
    %295 = vmatpush.msra.mxu0 %v106
    %296 = vmatpush.msra.mxu0 %v102
    %297 = vmatpush.msra.mxu0 %v98
    %298 = vmatpush.msra.mxu0 %v94
    %299 = vmatpush.msra.mxu0 %v90
    %300 = vmatmul.f32.gmra.mxu0 %v79
    %v301 = vpop.f32.mrf.mxu0
    %v302 = vadd.f32 %v156, %v301
    %303 = vmatmul.f32.gmra.mxu0 %v80
    %v304 = vpop.f32.mrf.mxu0
    %v305 = vadd.f32 %v156, %v304
    %306 = vmatmul.f32.gmra.mxu0 %v81
    %v307 = vpop.f32.mrf.mxu0
    %v308 = vadd.f32 %v156, %v307
    %309 = vmatmul.f32.gmra.mxu0 %v82
    %v310 = vpop.f32.mrf.mxu0
    %v311 = vadd.f32 %v156, %v310
    %312 = vmatmul.f32.gmra.mxu0 %v83
    %v313 = vpop.f32.mrf.mxu0
    %v314 = vadd.f32 %v156, %v313
    %315 = vmatmul.f32.gmra.mxu0 %v84
    %v316 = vpop.f32.mrf.mxu0
    %v317 = vadd.f32 %v156, %v316
    %318 = vmatmul.f32.gmra.mxu0 %v85
    %v319 = vpop.f32.mrf.mxu0
    %v320 = vadd.f32 %v156, %v319
    %321 = vmatmul.f32.gmra.mxu0 %v86
    %v322 = vpop.f32.mrf.mxu0
    %v323 = vadd.f32 %v156, %v322
    %324 = vdwg.mxu0
    %325 = vst [vmem:[#allocation2] sm:$0xff] %v179
    %326 = vst [vmem:[#allocation2 + $0x8] sm:$0xff] %v220
    %327 = vst [vmem:[#allocation2 + $0x10] sm:$0xff] %v261
    %328 = vst [vmem:[#allocation2 + $0x18] sm:$0xff] %v302
    %329 = vst [vmem:[#allocation2 + $0x20] sm:$0xff] %v182
    %330 = vst [vmem:[#allocation2 + $0x28] sm:$0xff] %v223
    %331 = vst [vmem:[#allocation2 + $0x30] sm:$0xff] %v264
    %332 = vst [vmem:[#allocation2 + $0x38] sm:$0xff] %v305
    %333 = vst [vmem:[#allocation2 + $0x40] sm:$0xff] %v185
    %334 = vst [vmem:[#allocation2 + $0x48] sm:$0xff] %v226
    %335 = vst [vmem:[#allocation2 + $0x50] sm:$0xff] %v267
    %336 = vst [vmem:[#allocation2 + $0x58] sm:$0xff] %v308
    %337 = vst [vmem:[#allocation2 + $0x60] sm:$0xff] %v188
    %338 = vst [vmem:[#allocation2 + $0x68] sm:$0xff] %v229
    %339 = vst [vmem:[#allocation2 + $0x70] sm:$0xff] %v270
    %340 = vst [vmem:[#allocation2 + $0x78] sm:$0xff] %v311
    %341 = vst [vmem:[#allocation2 + $0x80] sm:$0xff] %v191
    %342 = vst [vmem:[#allocation2 + $0x88] sm:$0xff] %v232
    %343 = vst [vmem:[#allocation2 + $0x90] sm:$0xff] %v273
    %344 = vst [vmem:[#allocation2 + $0x98] sm:$0xff] %v314
    %345 = vst [vmem:[#allocation2 + $0xa0] sm:$0xff] %v194
    %346 = vst [vmem:[#allocation2 + $0xa8] sm:$0xff] %v235
    %347 = vst [vmem:[#allocation2 + $0xb0] sm:$0xff] %v276
    %348 = vst [vmem:[#allocation2 + $0xb8] sm:$0xff] %v317
    %349 = vst [vmem:[#allocation2 + $0xc0] sm:$0xff] %v197
    %350 = vst [vmem:[#allocation2 + $0xc8] sm:$0xff] %v238
    %351 = vst [vmem:[#allocation2 + $0xd0] sm:$0xff] %v279
    %352 = vst [vmem:[#allocation2 + $0xd8] sm:$0xff] %v320
    %353 = vst [vmem:[#allocation2 + $0xe0] sm:$0xff] %v200
    %354 = vst [vmem:[#allocation2 + $0xe8] sm:$0xff] %v241
    %355 = vst [vmem:[#allocation2 + $0xf0] sm:$0xff] %v282
    %356 = vst [vmem:[#allocation2 + $0xf8] sm:$0xff] %v323
    %v357 = vld [vmem:[#allocation8] sm:$0xff]
    %v358 = vld [vmem:[#allocation8 + $0x8] sm:$0xff]
    %v359 = vld [vmem:[#allocation8 + $0x10] sm:$0xff]
    %v360 = vld [vmem:[#allocation8 + $0x18] sm:$0xff]
    %v361 = vld [vmem:[#allocation8 + $0x20] sm:$0xff]
    %v362 = vld [vmem:[#allocation8 + $0x28] sm:$0xff]
    %v363 = vld [vmem:[#allocation8 + $0x30] sm:$0xff]
    %v364 = vld [vmem:[#allocation8 + $0x38] sm:$0xff]
    %v365 = vld [vmem:[#allocation8 + $0x40] sm:$0xff]
    %v366 = vld [vmem:[#allocation8 + $0x48] sm:$0xff]
    %v367 = vld [vmem:[#allocation8 + $0x50] sm:$0xff]
    %v368 = vld [vmem:[#allocation8 + $0x58] sm:$0xff]
    %v369 = vld [vmem:[#allocation8 + $0x60] sm:$0xff]
    %v370 = vld [vmem:[#allocation8 + $0x68] sm:$0xff]
    %v371 = vld [vmem:[#allocation8 + $0x70] sm:$0xff]
    %v372 = vld [vmem:[#allocation8 + $0x78] sm:$0xff]
    %v373 = vld [vmem:[#allocation8 + $0x80] sm:$0xff]
    %v374 = vld [vmem:[#allocation8 + $0x88] sm:$0xff]
    %v375 = vld [vmem:[#allocation8 + $0x90] sm:$0xff]
    %v376 = vld [vmem:[#allocation8 + $0x98] sm:$0xff]
    %v377 = vld [vmem:[#allocation8 + $0xa0] sm:$0xff]
    %v378 = vld [vmem:[#allocation8 + $0xa8] sm:$0xff]
    %v379 = vld [vmem:[#allocation8 + $0xb0] sm:$0xff]
    %v380 = vld [vmem:[#allocation8 + $0xb8] sm:$0xff]
    %v381 = vld [vmem:[#allocation8 + $0xc0] sm:$0xff]
    %v382 = vld [vmem:[#allocation8 + $0xc8] sm:$0xff]
    %v383 = vld [vmem:[#allocation8 + $0xd0] sm:$0xff]
    %v384 = vld [vmem:[#allocation8 + $0xd8] sm:$0xff]
    %v385 = vld [vmem:[#allocation8 + $0xe0] sm:$0xff]
    %v386 = vld [vmem:[#allocation8 + $0xe8] sm:$0xff]
    %v387 = vld [vmem:[#allocation8 + $0xf0] sm:$0xff]
    %v388 = vld [vmem:[#allocation8 + $0xf8] sm:$0xff]
    %v389 = vld [vmem:[#allocation8 + $0x100] sm:$0xff]
    %v390 = vld [vmem:[#allocation8 + $0x108] sm:$0xff]
    %v391 = vld [vmem:[#allocation8 + $0x110] sm:$0xff]
    %v392 = vld [vmem:[#allocation8 + $0x118] sm:$0xff]
    %v393 = vld [vmem:[#allocation8 + $0x120] sm:$0xff]
    %v394 = vld [vmem:[#allocation8 + $0x128] sm:$0xff]
    %v395 = vld [vmem:[#allocation8 + $0x130] sm:$0xff]
    %v396 = vld [vmem:[#allocation8 + $0x138] sm:$0xff]
    %v397 = vld [vmem:[#allocation8 + $0x140] sm:$0xff]
    %v398 = vld [vmem:[#allocation8 + $0x148] sm:$0xff]
    %v399 = vld [vmem:[#allocation8 + $0x150] sm:$0xff]
    %v400 = vld [vmem:[#allocation8 + $0x158] sm:$0xff]
    %v401 = vld [vmem:[#allocation8 + $0x160] sm:$0xff]
    %v402 = vld [vmem:[#allocation8 + $0x168] sm:$0xff]
    %v403 = vld [vmem:[#allocation8 + $0x170] sm:$0xff]
    %v404 = vld [vmem:[#allocation8 + $0x178] sm:$0xff]
    %v405 = vld [vmem:[#allocation8 + $0x180] sm:$0xff]
    %v406 = vld [vmem:[#allocation8 + $0x188] sm:$0xff]
    %v407 = vld [vmem:[#allocation8 + $0x190] sm:$0xff]
    %v408 = vld [vmem:[#allocation8 + $0x198] sm:$0xff]
    %v409 = vld [vmem:[#allocation8 + $0x1a0] sm:$0xff]
    %v410 = vld [vmem:[#allocation8 + $0x1a8] sm:$0xff]
    %v411 = vld [vmem:[#allocation8 + $0x1b0] sm:$0xff]
    %v412 = vld [vmem:[#allocation8 + $0x1b8] sm:$0xff]
    %v413 = vld [vmem:[#allocation8 + $0x1c0] sm:$0xff]
    %v414 = vld [vmem:[#allocation8 + $0x1c8] sm:$0xff]
    %v415 = vld [vmem:[#allocation8 + $0x1d0] sm:$0xff]
    %v416 = vld [vmem:[#allocation8 + $0x1d8] sm:$0xff]
    %v417 = vld [vmem:[#allocation8 + $0x1e0] sm:$0xff]
    %v418 = vld [vmem:[#allocation8 + $0x1e8] sm:$0xff]
    %v419 = vld [vmem:[#allocation8 + $0x1f0] sm:$0xff]
    %v420 = vld [vmem:[#allocation8 + $0x1f8] sm:$0xff]
    %v421 = vld [vmem:[#allocation2] sm:$0xff]
    %v422 = vld [vmem:[#allocation2 + $0x8] sm:$0xff]
    %v423 = vld [vmem:[#allocation2 + $0x10] sm:$0xff]
    %v424 = vld [vmem:[#allocation2 + $0x18] sm:$0xff]
    %425 = vmatpush.msra.mxu0 %v417
    %426 = vmatpush.msra.mxu0 %v413
    %427 = vmatpush.msra.mxu0 %v409
    %428 = vmatpush.msra.mxu0 %v405
    %429 = vmatpush.msra.mxu0 %v401
    %430 = vmatpush.msra.mxu0 %v397
    %431 = vmatpush.msra.mxu0 %v393
    %432 = vmatpush.msra.mxu0 %v389
    %433 = vmatpush.msra.mxu0 %v385
    %434 = vmatpush.msra.mxu0 %v381
    %435 = vmatpush.msra.mxu0 %v377
    %436 = vmatpush.msra.mxu0 %v373
    %437 = vmatpush.msra.mxu0 %v369
    %438 = vmatpush.msra.mxu0 %v365
    %439 = vmatpush.msra.mxu0 %v361
    %440 = vmatpush.msra.mxu0 %v357
    %441 = vmatmul.f32.gmra.mxu0 0.0
    %v442 = vpop.f32.mrf.mxu0
    %v443 = vadd.f32 0.0, %v442
    %444 = vdwg.mxu0
    %445 = vmatpush.msra.mxu0 %v418
    %446 = vmatpush.msra.mxu0 %v414
    %447 = vmatpush.msra.mxu0 %v410
    %448 = vmatpush.msra.mxu0 %v406
    %449 = vmatpush.msra.mxu0 %v402
    %450 = vmatpush.msra.mxu0 %v398
    %451 = vmatpush.msra.mxu0 %v394
    %452 = vmatpush.msra.mxu0 %v390
    %453 = vmatpush.msra.mxu0 %v386
    %454 = vmatpush.msra.mxu0 %v382
    %455 = vmatpush.msra.mxu0 %v378
    %456 = vmatpush.msra.mxu0 %v374
    %457 = vmatpush.msra.mxu0 %v370
    %458 = vmatpush.msra.mxu0 %v366
    %459 = vmatpush.msra.mxu0 %v362
    %460 = vmatpush.msra.mxu0 %v358
    %461 = vmatmul.f32.gmra.mxu0 0.0
    %v462 = vpop.f32.mrf.mxu0
    %v463 = vadd.f32 0.0, %v462
    %464 = vdwg.mxu0
    %465 = vmatpush.msra.mxu0 %v419
    %466 = vmatpush.msra.mxu0 %v415
    %467 = vmatpush.msra.mxu0 %v411
    %468 = vmatpush.msra.mxu0 %v407
    %469 = vmatpush.msra.mxu0 %v403
    %470 = vmatpush.msra.mxu0 %v399
    %471 = vmatpush.msra.mxu0 %v395
    %472 = vmatpush.msra.mxu0 %v391
    %473 = vmatpush.msra.mxu0 %v387
    %474 = vmatpush.msra.mxu0 %v383
    %475 = vmatpush.msra.mxu0 %v379
    %476 = vmatpush.msra.mxu0 %v375
    %477 = vmatpush.msra.mxu0 %v371
    %478 = vmatpush.msra.mxu0 %v367
    %479 = vmatpush.msra.mxu0 %v363
    %480 = vmatpush.msra.mxu0 %v359
    %481 = vmatmul.f32.gmra.mxu0 0.0
    %v482 = vpop.f32.mrf.mxu0
    %v483 = vadd.f32 0.0, %v482
    %484 = vdwg.mxu0
    %485 = vmatpush.msra.mxu0 %v420
    %486 = vmatpush.msra.mxu0 %v416
    %487 = vmatpush.msra.mxu0 %v412
    %488 = vmatpush.msra.mxu0 %v408
    %489 = vmatpush.msra.mxu0 %v404
    %490 = vmatpush.msra.mxu0 %v400
    %491 = vmatpush.msra.mxu0 %v396
    %492 = vmatpush.msra.mxu0 %v392
    %493 = vmatpush.msra.mxu0 %v388
    %494 = vmatpush.msra.mxu0 %v384
    %495 = vmatpush.msra.mxu0 %v380
    %496 = vmatpush.msra.mxu0 %v376
    %497 = vmatpush.msra.mxu0 %v372
    %498 = vmatpush.msra.mxu0 %v368
    %499 = vmatpush.msra.mxu0 %v364
    %500 = vmatpush.msra.mxu0 %v360
    %501 = vmatmul.f32.gmra.mxu0 0.0
    %v502 = vpop.f32.mrf.mxu0
    %v503 = vadd.f32 0.0, %v502
    %504 = vdwg.mxu0
    %v505 = vadd.f32 %v421, %v443
    %v506 = vadd.f32 %v422, %v463
    %v507 = vadd.f32 %v423, %v483
    %v508 = vadd.f32 %v424, %v503
    %v509 = vxor.u32 %v505, 2147483648
    %v510 = vmul.f32 %v509, 1.442695
    %v511 = vpow.pop %v510
    %v512 = vadd.f32 %v511, 1.0
    %v513 = vrcp.pop %v512
    %v514 = vmul.f32 %v512, %v513
    %v515 = vsub.f32 1.0, %v514
    %v516 = vmul.f32 %v513, %v515
    %v517 = vadd.f32 %v513, %v516
    %vm518 = vweird.f32 %v512
    %vm519 = vweird.f32 %v513
    %vm520 = vmor %vm518, %vm519
    %v521 = vsel %vm520, %v513, %v517
    %v522 = vand.u32 2147483647, %v512
    %vm523 = vcmp.eq.f32.partialorder %v522, 8.507059e+37
    %v524 = vand.u32 %v512, 2147483648
    %v525 = vor.u32 1.1754944e-38, %v524
    %v526 = vsel %vm523, %v525, %v521
    %v527 = vmul.f32 1.0, %v526
    %v528 = vxor.u32 %v506, 2147483648
    %v529 = vmul.f32 %v528, 1.442695
    %v530 = vpow.pop %v529
    %v531 = vadd.f32 %v530, 1.0
    %v532 = vrcp.pop %v531
    %v533 = vmul.f32 %v531, %v532
    %v534 = vsub.f32 1.0, %v533
    %v535 = vmul.f32 %v532, %v534
    %v536 = vadd.f32 %v532, %v535
    %vm537 = vweird.f32 %v531
    %vm538 = vweird.f32 %v532
    %vm539 = vmor %vm537, %vm538
    %v540 = vsel %vm539, %v532, %v536
    %v541 = vand.u32 2147483647, %v531
    %vm542 = vcmp.eq.f32.partialorder %v541, 8.507059e+37
    %v543 = vand.u32 %v531, 2147483648
    %v544 = vor.u32 1.1754944e-38, %v543
    %v545 = vsel %vm542, %v544, %v540
    %v546 = vmul.f32 1.0, %v545
    %v547 = vtanh.pop %v507
    %v548 = vxor.u32 %v508, 2147483648
    %v549 = vmul.f32 %v548, 1.442695
    %v550 = vpow.pop %v549
    %v551 = vadd.f32 %v550, 1.0
    %v552 = vrcp.pop %v551
    %v553 = vmul.f32 %v551, %v552
    %v554 = vsub.f32 1.0, %v553
    %v555 = vmul.f32 %v552, %v554
    %v556 = vadd.f32 %v552, %v555
    %vm557 = vweird.f32 %v551
    %vm558 = vweird.f32 %v552
    %vm559 = vmor %vm557, %vm558
    %v560 = vsel %vm559, %v552, %v556
    %v561 = vand.u32 2147483647, %v551
    %vm562 = vcmp.eq.f32.partialorder %v561, 8.507059e+37
    %v563 = vand.u32 %v551, 2147483648
    %v564 = vor.u32 1.1754944e-38, %v563
    %v565 = vsel %vm562, %v564, %v560
    %v566 = vmul.f32 1.0, %v565
    %v567 = vmul.f32 %v546, 0.0
    %v568 = vmul.f32 %v527, %v547
    %v569 = vadd.f32 %v567, %v568
    %v570 = vtanh.pop %v569
    %v571 = vmul.f32 %v566, %v570
    %572 = vst [vmem:[#allocation11] sm:$0xff] %v571
    %s573 = scalar_lea.vmem [#allocation2], 32
    %v574 = vld [vmem:[%s573] sm:$0xff]
    %v575 = vld [vmem:[%s573 + $0x8] sm:$0xff]
    %v576 = vld [vmem:[%s573 + $0x10] sm:$0xff]
    %v577 = vld [vmem:[%s573 + $0x18] sm:$0xff]
    %578 = vmatpush.msra.mxu0 %v417
    %579 = vmatpush.msra.mxu0 %v413
    %580 = vmatpush.msra.mxu0 %v409
    %581 = vmatpush.msra.mxu0 %v405
    %582 = vmatpush.msra.mxu0 %v401
    %583 = vmatpush.msra.mxu0 %v397
    %584 = vmatpush.msra.mxu0 %v393
    %585 = vmatpush.msra.mxu0 %v389
    %586 = vmatpush.msra.mxu0 %v385
    %587 = vmatpush.msra.mxu0 %v381
    %588 = vmatpush.msra.mxu0 %v377
    %589 = vmatpush.msra.mxu0 %v373
    %590 = vmatpush.msra.mxu0 %v369
    %591 = vmatpush.msra.mxu0 %v365
    %592 = vmatpush.msra.mxu0 %v361
    %593 = vmatpush.msra.mxu0 %v357
    %594 = vmatmul.f32.gmra.mxu0 %v571
    %v595 = vpop.f32.mrf.mxu0
    %v596 = vadd.f32 0.0, %v595
    %597 = vdwg.mxu0
    %598 = vmatpush.msra.mxu0 %v418
    %599 = vmatpush.msra.mxu0 %v414
    %600 = vmatpush.msra.mxu0 %v410
    %601 = vmatpush.msra.mxu0 %v406
    %602 = vmatpush.msra.mxu0 %v402
    %603 = vmatpush.msra.mxu0 %v398
    %604 = vmatpush.msra.mxu0 %v394
    %605 = vmatpush.msra.mxu0 %v390
    %606 = vmatpush.msra.mxu0 %v386
    %607 = vmatpush.msra.mxu0 %v382
    %608 = vmatpush.msra.mxu0 %v378
    %609 = vmatpush.msra.mxu0 %v374
    %610 = vmatpush.msra.mxu0 %v370
    %611 = vmatpush.msra.mxu0 %v366
    %612 = vmatpush.msra.mxu0 %v362
    %613 = vmatpush.msra.mxu0 %v358
    %614 = vmatmul.f32.gmra.mxu0 %v571
    %v615 = vpop.f32.mrf.mxu0
    %v616 = vadd.f32 0.0, %v615
    %617 = vdwg.mxu0
    %618 = vmatpush.msra.mxu0 %v419
    %619 = vmatpush.msra.mxu0 %v415
    %620 = vmatpush.msra.mxu0 %v411
    %621 = vmatpush.msra.mxu0 %v407
    %622 = vmatpush.msra.mxu0 %v403
    %623 = vmatpush.msra.mxu0 %v399
    %624 = vmatpush.msra.mxu0 %v395
    %625 = vmatpush.msra.mxu0 %v391
    %626 = vmatpush.msra.mxu0 %v387
    %627 = vmatpush.msra.mxu0 %v383
    %628 = vmatpush.msra.mxu0 %v379
    %629 = vmatpush.msra.mxu0 %v375
    %630 = vmatpush.msra.mxu0 %v371
    %631 = vmatpush.msra.mxu0 %v367
    %632 = vmatpush.msra.mxu0 %v363
    %633 = vmatpush.msra.mxu0 %v359
    %634 = vmatmul.f32.gmra.mxu0 %v571
    %v635 = vpop.f32.mrf.mxu0
    %v636 = vadd.f32 0.0, %v635
    %637 = vdwg.mxu0
    %638 = vmatpush.msra.mxu0 %v420
    %639 = vmatpush.msra.mxu0 %v416
    %640 = vmatpush.msra.mxu0 %v412
    %641 = vmatpush.msra.mxu0 %v408
    %642 = vmatpush.msra.mxu0 %v404
    %643 = vmatpush.msra.mxu0 %v400
    %644 = vmatpush.msra.mxu0 %v396
    %645 = vmatpush.msra.mxu0 %v392
    %646 = vmatpush.msra.mxu0 %v388
    %647 = vmatpush.msra.mxu0 %v384
    %648 = vmatpush.msra.mxu0 %v380
    %649 = vmatpush.msra.mxu0 %v376
    %650 = vmatpush.msra.mxu0 %v372
    %651 = vmatpush.msra.mxu0 %v368
    %652 = vmatpush.msra.mxu0 %v364
    %653 = vmatpush.msra.mxu0 %v360
    %654 = vmatmul.f32.gmra.mxu0 %v571
    %v655 = vpop.f32.mrf.mxu0
    %v656 = vadd.f32 0.0, %v655
    %657 = vdwg.mxu0
    %v658 = vadd.f32 %v574, %v596
    %v659 = vadd.f32 %v575, %v616
    %v660 = vadd.f32 %v576, %v636
    %v661 = vadd.f32 %v577, %v656
    %v662 = vxor.u32 %v658, 2147483648
    %v663 = vmul.f32 %v662, 1.442695
    %v664 = vpow.pop %v663
    %v665 = vadd.f32 %v664, 1.0
    %v666 = vrcp.pop %v665
    %v667 = vmul.f32 %v665, %v666
    %v668 = vsub.f32 1.0, %v667
    %v669 = vmul.f32 %v666, %v668
    %v670 = vadd.f32 %v666, %v669
    %vm671 = vweird.f32 %v665
    %vm672 = vweird.f32 %v666
    %vm673 = vmor %vm671, %vm672
    %v674 = vsel %vm673, %v666, %v670
    %v675 = vand.u32 2147483647, %v665
    %vm676 = vcmp.eq.f32.partialorder %v675, 8.507059e+37
    %v677 = vand.u32 %v665, 2147483648
    %v678 = vor.u32 1.1754944e-38, %v677
    %v679 = vsel %vm676, %v678, %v674
    %v680 = vmul.f32 1.0, %v679
    %v681 = vxor.u32 %v659, 2147483648
    %v682 = vmul.f32 %v681, 1.442695
    %v683 = vpow.pop %v682
    %v684 = vadd.f32 %v683, 1.0
    %v685 = vrcp.pop %v684
    %v686 = vmul.f32 %v684, %v685
    %v687 = vsub.f32 1.0, %v686
    %v688 = vmul.f32 %v685, %v687
    %v689 = vadd.f32 %v685, %v688
    %vm690 = vweird.f32 %v684
    %vm691 = vweird.f32 %v685
    %vm692 = vmor %vm690, %vm691
    %v693 = vsel %vm692, %v685, %v689
    %v694 = vand.u32 2147483647, %v684
    %vm695 = vcmp.eq.f32.partialorder %v694, 8.507059e+37
    %v696 = vand.u32 %v684, 2147483648
    %v697 = vor.u32 1.1754944e-38, %v696
    %v698 = vsel %vm695, %v697, %v693
    %v699 = vmul.f32 1.0, %v698
    %v700 = vtanh.pop %v660
    %v701 = vxor.u32 %v661, 2147483648
    %v702 = vmul.f32 %v701, 1.442695
    %v703 = vpow.pop %v702
    %v704 = vadd.f32 %v703, 1.0
    %v705 = vrcp.pop %v704
    %v706 = vmul.f32 %v704, %v705
    %v707 = vsub.f32 1.0, %v706
    %v708 = vmul.f32 %v705, %v707
    %v709 = vadd.f32 %v705, %v708
    %vm710 = vweird.f32 %v704
    %vm711 = vweird.f32 %v705
    %vm712 = vmor %vm710, %vm711
    %v713 = vsel %vm712, %v705, %v709
    %v714 = vand.u32 2147483647, %v704
    %vm715 = vcmp.eq.f32.partialorder %v714, 8.507059e+37
    %v716 = vand.u32 %v704, 2147483648
    %v717 = vor.u32 1.1754944e-38, %v716
    %v718 = vsel %vm715, %v717, %v713
    %v719 = vmul.f32 1.0, %v718
    %v720 = vmul.f32 %v699, %v569
    %v721 = vmul.f32 %v680, %v700
    %v722 = vadd.f32 %v720, %v721
    %v723 = vtanh.pop %v722
    %v724 = vmul.f32 %v719, %v723
    %s725 = scalar_lea.vmem [#allocation11], 8
    %726 = vst [vmem:[%s725] sm:$0xff] %v724
    %s727 = scalar_lea.vmem [#allocation2], 64
    %v728 = vld [vmem:[%s727] sm:$0xff]
    %v729 = vld [vmem:[%s727 + $0x8] sm:$0xff]
    %v730 = vld [vmem:[%s727 + $0x10] sm:$0xff]
    %v731 = vld [vmem:[%s727 + $0x18] sm:$0xff]
    %732 = vmatpush.msra.mxu0 %v417
    %733 = vmatpush.msra.mxu0 %v413
    %734 = vmatpush.msra.mxu0 %v409
    %735 = vmatpush.msra.mxu0 %v405
    %736 = vmatpush.msra.mxu0 %v401
    %737 = vmatpush.msra.mxu0 %v397
    %738 = vmatpush.msra.mxu0 %v393
    %739 = vmatpush.msra.mxu0 %v389
    %740 = vmatpush.msra.mxu0 %v385
    %741 = vmatpush.msra.mxu0 %v381
    %742 = vmatpush.msra.mxu0 %v377
    %743 = vmatpush.msra.mxu0 %v373
    %744 = vmatpush.msra.mxu0 %v369
    %745 = vmatpush.msra.mxu0 %v365
    %746 = vmatpush.msra.mxu0 %v361
    %747 = vmatpush.msra.mxu0 %v357
    %748 = vmatmul.f32.gmra.mxu0 %v724
    %v749 = vpop.f32.mrf.mxu0
    %v750 = vadd.f32 0.0, %v749
    %751 = vdwg.mxu0
    %752 = vmatpush.msra.mxu0 %v418
    %753 = vmatpush.msra.mxu0 %v414
    %754 = vmatpush.msra.mxu0 %v410
    %755 = vmatpush.msra.mxu0 %v406
    %756 = vmatpush.msra.mxu0 %v402
    %757 = vmatpush.msra.mxu0 %v398
    %758 = vmatpush.msra.mxu0 %v394
    %759 = vmatpush.msra.mxu0 %v390
    %760 = vmatpush.msra.mxu0 %v386
    %761 = vmatpush.msra.mxu0 %v382
    %762 = vmatpush.msra.mxu0 %v378
    %763 = vmatpush.msra.mxu0 %v374
    %764 = vmatpush.msra.mxu0 %v370
    %765 = vmatpush.msra.mxu0 %v366
    %766 = vmatpush.msra.mxu0 %v362
    %767 = vmatpush.msra.mxu0 %v358
    %768 = vmatmul.f32.gmra.mxu0 %v724
    %v769 = vpop.f32.mrf.mxu0
    %v770 = vadd.f32 0.0, %v769
    %771 = vdwg.mxu0
    %772 = vmatpush.msra.mxu0 %v419
    %773 = vmatpush.msra.mxu0 %v415
    %774 = vmatpush.msra.mxu0 %v411
    %775 = vmatpush.msra.mxu0 %v407
    %776 = vmatpush.msra.mxu0 %v403
    %777 = vmatpush.msra.mxu0 %v399
    %778 = vmatpush.msra.mxu0 %v395
    %779 = vmatpush.msra.mxu0 %v391
    %780 = vmatpush.msra.mxu0 %v387
    %781 = vmatpush.msra.mxu0 %v383
    %782 = vmatpush.msra.mxu0 %v379
    %783 = vmatpush.msra.mxu0 %v375
    %784 = vmatpush.msra.mxu0 %v371
    %785 = vmatpush.msra.mxu0 %v367
    %786 = vmatpush.msra.mxu0 %v363
    %787 = vmatpush.msra.mxu0 %v359
    %788 = vmatmul.f32.gmra.mxu0 %v724
    %v789 = vpop.f32.mrf.mxu0
    %v790 = vadd.f32 0.0, %v789
    %791 = vdwg.mxu0
    %792 = vmatpush.msra.mxu0 %v420
    %793 = vmatpush.msra.mxu0 %v416
    %794 = vmatpush.msra.mxu0 %v412
    %795 = vmatpush.msra.mxu0 %v408
    %796 = vmatpush.msra.mxu0 %v404
    %797 = vmatpush.msra.mxu0 %v400
    %798 = vmatpush.msra.mxu0 %v396
    %799 = vmatpush.msra.mxu0 %v392
    %800 = vmatpush.msra.mxu0 %v388
    %801 = vmatpush.msra.mxu0 %v384
    %802 = vmatpush.msra.mxu0 %v380
    %803 = vmatpush.msra.mxu0 %v376
    %804 = vmatpush.msra.mxu0 %v372
    %805 = vmatpush.msra.mxu0 %v368
    %806 = vmatpush.msra.mxu0 %v364
    %807 = vmatpush.msra.mxu0 %v360
    %808 = vmatmul.f32.gmra.mxu0 %v724
    %v809 = vpop.f32.mrf.mxu0
    %v810 = vadd.f32 0.0, %v809
    %811 = vdwg.mxu0
    %v812 = vadd.f32 %v728, %v750
    %v813 = vadd.f32 %v729, %v770
    %v814 = vadd.f32 %v730, %v790
    %v815 = vadd.f32 %v731, %v810
    %v816 = vxor.u32 %v812, 2147483648
    %v817 = vmul.f32 %v816, 1.442695
    %v818 = vpow.pop %v817
    %v819 = vadd.f32 %v818, 1.0
    %v820 = vrcp.pop %v819
    %v821 = vmul.f32 %v819, %v820
    %v822 = vsub.f32 1.0, %v821
    %v823 = vmul.f32 %v820, %v822
    %v824 = vadd.f32 %v820, %v823
    %vm825 = vweird.f32 %v819
    %vm826 = vweird.f32 %v820
    %vm827 = vmor %vm825, %vm826
    %v828 = vsel %vm827, %v820, %v824
    %v829 = vand.u32 2147483647, %v819
    %vm830 = vcmp.eq.f32.partialorder %v829, 8.507059e+37
    %v831 = vand.u32 %v819, 2147483648
    %v832 = vor.u32 1.1754944e-38, %v831
    %v833 = vsel %vm830, %v832, %v828
    %v834 = vmul.f32 1.0, %v833
    %v835 = vxor.u32 %v813, 2147483648
    %v836 = vmul.f32 %v835, 1.442695
    %v837 = vpow.pop %v836
    %v838 = vadd.f32 %v837, 1.0
    %v839 = vrcp.pop %v838
    %v840 = vmul.f32 %v838, %v839
    %v841 = vsub.f32 1.0, %v840
    %v842 = vmul.f32 %v839, %v841
    %v843 = vadd.f32 %v839, %v842
    %vm844 = vweird.f32 %v838
    %vm845 = vweird.f32 %v839
    %vm846 = vmor %vm844, %vm845
    %v847 = vsel %vm846, %v839, %v843
    %v848 = vand.u32 2147483647, %v838
    %vm849 = vcmp.eq.f32.partialorder %v848, 8.507059e+37
    %v850 = vand.u32 %v838, 2147483648
    %v851 = vor.u32 1.1754944e-38, %v850
    %v852 = vsel %vm849, %v851, %v847
    %v853 = vmul.f32 1.0, %v852
    %v854 = vtanh.pop %v814
    %v855 = vxor.u32 %v815, 2147483648
    %v856 = vmul.f32 %v855, 1.442695
    %v857 = vpow.pop %v856
    %v858 = vadd.f32 %v857, 1.0
    %v859 = vrcp.pop %v858
    %v860 = vmul.f32 %v858, %v859
    %v861 = vsub.f32 1.0, %v860
    %v862 = vmul.f32 %v859, %v861
    %v863 = vadd.f32 %v859, %v862
    %vm864 = vweird.f32 %v858
    %vm865 = vweird.f32 %v859
    %vm866 = vmor %vm864, %vm865
    %v867 = vsel %vm866, %v859, %v863
    %v868 = vand.u32 2147483647, %v858
    %vm869 = vcmp.eq.f32.partialorder %v868, 8.507059e+37
    %v870 = vand.u32 %v858, 2147483648
    %v871 = vor.u32 1.1754944e-38, %v870
    %v872 = vsel %vm869, %v871, %v867
    %v873 = vmul.f32 1.0, %v872
    %v874 = vmul.f32 %v853, %v722
    %v875 = vmul.f32 %v834, %v854
    %v876 = vadd.f32 %v874, %v875
    %v877 = vtanh.pop %v876
    %v878 = vmul.f32 %v873, %v877
    %s879 = scalar_lea.vmem [#allocation11], 16
    %880 = vst [vmem:[%s879] sm:$0xff] %v878
    %s881 = scalar_lea.vmem [#allocation2], 96
    %v882 = vld [vmem:[%s881] sm:$0xff]
    %v883 = vld [vmem:[%s881 + $0x8] sm:$0xff]
    %v884 = vld [vmem:[%s881 + $0x10] sm:$0xff]
    %v885 = vld [vmem:[%s881 + $0x18] sm:$0xff]
    %886 = vmatpush.msra.mxu0 %v417
    %887 = vmatpush.msra.mxu0 %v413
    %888 = vmatpush.msra.mxu0 %v409
    %889 = vmatpush.msra.mxu0 %v405
    %890 = vmatpush.msra.mxu0 %v401
    %891 = vmatpush.msra.mxu0 %v397
    %892 = vmatpush.msra.mxu0 %v393
    %893 = vmatpush.msra.mxu0 %v389
    %894 = vmatpush.msra.mxu0 %v385
    %895 = vmatpush.msra.mxu0 %v381
    %896 = vmatpush.msra.mxu0 %v377
    %897 = vmatpush.msra.mxu0 %v373
    %898 = vmatpush.msra.mxu0 %v369
    %899 = vmatpush.msra.mxu0 %v365
    %900 = vmatpush.msra.mxu0 %v361
    %901 = vmatpush.msra.mxu0 %v357
    %902 = vmatmul.f32.gmra.mxu0 %v878
    %v903 = vpop.f32.mrf.mxu0
    %v904 = vadd.f32 0.0, %v903
    %905 = vdwg.mxu0
    %906 = vmatpush.msra.mxu0 %v418
    %907 = vmatpush.msra.mxu0 %v414
    %908 = vmatpush.msra.mxu0 %v410
    %909 = vmatpush.msra.mxu0 %v406
    %910 = vmatpush.msra.mxu0 %v402
    %911 = vmatpush.msra.mxu0 %v398
    %912 = vmatpush.msra.mxu0 %v394
    %913 = vmatpush.msra.mxu0 %v390
    %914 = vmatpush.msra.mxu0 %v386
    %915 = vmatpush.msra.mxu0 %v382
    %916 = vmatpush.msra.mxu0 %v378
    %917 = vmatpush.msra.mxu0 %v374
    %918 = vmatpush.msra.mxu0 %v370
    %919 = vmatpush.msra.mxu0 %v366
    %920 = vmatpush.msra.mxu0 %v362
    %921 = vmatpush.msra.mxu0 %v358
    %922 = vmatmul.f32.gmra.mxu0 %v878
    %v923 = vpop.f32.mrf.mxu0
    %v924 = vadd.f32 0.0, %v923
    %925 = vdwg.mxu0
    %926 = vmatpush.msra.mxu0 %v419
    %927 = vmatpush.msra.mxu0 %v415
    %928 = vmatpush.msra.mxu0 %v411
    %929 = vmatpush.msra.mxu0 %v407
    %930 = vmatpush.msra.mxu0 %v403
    %931 = vmatpush.msra.mxu0 %v399
    %932 = vmatpush.msra.mxu0 %v395
    %933 = vmatpush.msra.mxu0 %v391
    %934 = vmatpush.msra.mxu0 %v387
    %935 = vmatpush.msra.mxu0 %v383
    %936 = vmatpush.msra.mxu0 %v379
    %937 = vmatpush.msra.mxu0 %v375
    %938 = vmatpush.msra.mxu0 %v371
    %939 = vmatpush.msra.mxu0 %v367
    %940 = vmatpush.msra.mxu0 %v363
    %941 = vmatpush.msra.mxu0 %v359
    %942 = vmatmul.f32.gmra.mxu0 %v878
    %v943 = vpop.f32.mrf.mxu0
    %v944 = vadd.f32 0.0, %v943
    %945 = vdwg.mxu0
    %946 = vmatpush.msra.mxu0 %v420
    %947 = vmatpush.msra.mxu0 %v416
    %948 = vmatpush.msra.mxu0 %v412
    %949 = vmatpush.msra.mxu0 %v408
    %950 = vmatpush.msra.mxu0 %v404
    %951 = vmatpush.msra.mxu0 %v400
    %952 = vmatpush.msra.mxu0 %v396
    %953 = vmatpush.msra.mxu0 %v392
    %954 = vmatpush.msra.mxu0 %v388
    %955 = vmatpush.msra.mxu0 %v384
    %956 = vmatpush.msra.mxu0 %v380
    %957 = vmatpush.msra.mxu0 %v376
    %958 = vmatpush.msra.mxu0 %v372
    %959 = vmatpush.msra.mxu0 %v368
    %960 = vmatpush.msra.mxu0 %v364
    %961 = vmatpush.msra.mxu0 %v360
    %962 = vmatmul.f32.gmra.mxu0 %v878
    %v963 = vpop.f32.mrf.mxu0
    %v964 = vadd.f32 0.0, %v963
    %965 = vdwg.mxu0
    %v966 = vadd.f32 %v882, %v904
    %v967 = vadd.f32 %v883, %v924
    %v968 = vadd.f32 %v884, %v944
    %v969 = vadd.f32 %v885, %v964
    %v970 = vxor.u32 %v966, 2147483648
    %v971 = vmul.f32 %v970, 1.442695
    %v972 = vpow.pop %v971
    %v973 = vadd.f32 %v972, 1.0
    %v974 = vrcp.pop %v973
    %v975 = vmul.f32 %v973, %v974
    %v976 = vsub.f32 1.0, %v975
    %v977 = vmul.f32 %v974, %v976
    %v978 = vadd.f32 %v974, %v977
    %vm979 = vweird.f32 %v973
    %vm980 = vweird.f32 %v974
    %vm981 = vmor %vm979, %vm980
    %v982 = vsel %vm981, %v974, %v978
    %v983 = vand.u32 2147483647, %v973
    %vm984 = vcmp.eq.f32.partialorder %v983, 8.507059e+37
    %v985 = vand.u32 %v973, 2147483648
    %v986 = vor.u32 1.1754944e-38, %v985
    %v987 = vsel %vm984, %v986, %v982
    %v988 = vmul.f32 1.0, %v987
    %v989 = vxor.u32 %v967, 2147483648
    %v990 = vmul.f32 %v989, 1.442695
    %v991 = vpow.pop %v990
    %v992 = vadd.f32 %v991, 1.0
    %v993 = vrcp.pop %v992
    %v994 = vmul.f32 %v992, %v993
    %v995 = vsub.f32 1.0, %v994
    %v996 = vmul.f32 %v993, %v995
    %v997 = vadd.f32 %v993, %v996
    %vm998 = vweird.f32 %v992
    %vm999 = vweird.f32 %v993
    %vm1000 = vmor %vm998, %vm999
    %v1001 = vsel %vm1000, %v993, %v997
    %v1002 = vand.u32 2147483647, %v992
    %vm1003 = vcmp.eq.f32.partialorder %v1002, 8.507059e+37
    %v1004 = vand.u32 %v992, 2147483648
    %v1005 = vor.u32 1.1754944e-38, %v1004
    %v1006 = vsel %vm1003, %v1005, %v1001
    %v1007 = vmul.f32 1.0, %v1006
    %v1008 = vtanh.pop %v968
    %v1009 = vxor.u32 %v969, 2147483648
    %v1010 = vmul.f32 %v1009, 1.442695
    %v1011 = vpow.pop %v1010
    %v1012 = vadd.f32 %v1011, 1.0
    %v1013 = vrcp.pop %v1012
    %v1014 = vmul.f32 %v1012, %v1013
    %v1015 = vsub.f32 1.0, %v1014
    %v1016 = vmul.f32 %v1013, %v1015
    %v1017 = vadd.f32 %v1013, %v1016
    %vm1018 = vweird.f32 %v1012
    %vm1019 = vweird.f32 %v1013
    %vm1020 = vmor %vm1018, %vm1019
    %v1021 = vsel %vm1020, %v1013, %v1017
    %v1022 = vand.u32 2147483647, %v1012
    %vm1023 = vcmp.eq.f32.partialorder %v1022, 8.507059e+37
    %v1024 = vand.u32 %v1012, 2147483648
    %v1025 = vor.u32 1.1754944e-38, %v1024
    %v1026 = vsel %vm1023, %v1025, %v1021
    %v1027 = vmul.f32 1.0, %v1026
    %v1028 = vmul.f32 %v1007, %v876
    %v1029 = vmul.f32 %v988, %v1008
    %v1030 = vadd.f32 %v1028, %v1029
    %v1031 = vtanh.pop %v1030
    %v1032 = vmul.f32 %v1027, %v1031
    %s1033 = scalar_lea.vmem [#allocation11], 24
    %1034 = vst [vmem:[%s1033] sm:$0xff] %v1032
    %s1035 = scalar_lea.vmem [#allocation2], 128
    %v1036 = vld [vmem:[%s1035] sm:$0xff]
    %v1037 = vld [vmem:[%s1035 + $0x8] sm:$0xff]
    %v1038 = vld [vmem:[%s1035 + $0x10] sm:$0xff]
    %v1039 = vld [vmem:[%s1035 + $0x18] sm:$0xff]
    %1040 = vmatpush.msra.mxu0 %v417
    %1041 = vmatpush.msra.mxu0 %v413
    %1042 = vmatpush.msra.mxu0 %v409
    %1043 = vmatpush.msra.mxu0 %v405
    %1044 = vmatpush.msra.mxu0 %v401
    %1045 = vmatpush.msra.mxu0 %v397
    %1046 = vmatpush.msra.mxu0 %v393
    %1047 = vmatpush.msra.mxu0 %v389
    %1048 = vmatpush.msra.mxu0 %v385
    %1049 = vmatpush.msra.mxu0 %v381
    %1050 = vmatpush.msra.mxu0 %v377
    %1051 = vmatpush.msra.mxu0 %v373
    %1052 = vmatpush.msra.mxu0 %v369
    %1053 = vmatpush.msra.mxu0 %v365
    %1054 = vmatpush.msra.mxu0 %v361
    %1055 = vmatpush.msra.mxu0 %v357
    %1056 = vmatmul.f32.gmra.mxu0 %v1032
    %v1057 = vpop.f32.mrf.mxu0
    %v1058 = vadd.f32 0.0, %v1057
    %1059 = vdwg.mxu0
    %1060 = vmatpush.msra.mxu0 %v418
    %1061 = vmatpush.msra.mxu0 %v414
    %1062 = vmatpush.msra.mxu0 %v410
    %1063 = vmatpush.msra.mxu0 %v406
    %1064 = vmatpush.msra.mxu0 %v402
    %1065 = vmatpush.msra.mxu0 %v398
    %1066 = vmatpush.msra.mxu0 %v394
    %1067 = vmatpush.msra.mxu0 %v390
    %1068 = vmatpush.msra.mxu0 %v386
    %1069 = vmatpush.msra.mxu0 %v382
    %1070 = vmatpush.msra.mxu0 %v378
    %1071 = vmatpush.msra.mxu0 %v374
    %1072 = vmatpush.msra.mxu0 %v370
    %1073 = vmatpush.msra.mxu0 %v366
    %1074 = vmatpush.msra.mxu0 %v362
    %1075 = vmatpush.msra.mxu0 %v358
    %1076 = vmatmul.f32.gmra.mxu0 %v1032
    %v1077 = vpop.f32.mrf.mxu0
    %v1078 = vadd.f32 0.0, %v1077
    %1079 = vdwg.mxu0
    %1080 = vmatpush.msra.mxu0 %v419
    %1081 = vmatpush.msra.mxu0 %v415
    %1082 = vmatpush.msra.mxu0 %v411
    %1083 = vmatpush.msra.mxu0 %v407
    %1084 = vmatpush.msra.mxu0 %v403
    %1085 = vmatpush.msra.mxu0 %v399
    %1086 = vmatpush.msra.mxu0 %v395
    %1087 = vmatpush.msra.mxu0 %v391
    %1088 = vmatpush.msra.mxu0 %v387
    %1089 = vmatpush.msra.mxu0 %v383
    %1090 = vmatpush.msra.mxu0 %v379
    %1091 = vmatpush.msra.mxu0 %v375
    %1092 = vmatpush.msra.mxu0 %v371
    %1093 = vmatpush.msra.mxu0 %v367
    %1094 = vmatpush.msra.mxu0 %v363
    %1095 = vmatpush.msra.mxu0 %v359
    %1096 = vmatmul.f32.gmra.mxu0 %v1032
    %v1097 = vpop.f32.mrf.mxu0
    %v1098 = vadd.f32 0.0, %v1097
    %1099 = vdwg.mxu0
    %1100 = vmatpush.msra.mxu0 %v420
    %1101 = vmatpush.msra.mxu0 %v416
    %1102 = vmatpush.msra.mxu0 %v412
    %1103 = vmatpush.msra.mxu0 %v408
    %1104 = vmatpush.msra.mxu0 %v404
    %1105 = vmatpush.msra.mxu0 %v400
    %1106 = vmatpush.msra.mxu0 %v396
    %1107 = vmatpush.msra.mxu0 %v392
    %1108 = vmatpush.msra.mxu0 %v388
    %1109 = vmatpush.msra.mxu0 %v384
    %1110 = vmatpush.msra.mxu0 %v380
    %1111 = vmatpush.msra.mxu0 %v376
    %1112 = vmatpush.msra.mxu0 %v372
    %1113 = vmatpush.msra.mxu0 %v368
    %1114 = vmatpush.msra.mxu0 %v364
    %1115 = vmatpush.msra.mxu0 %v360
    %1116 = vmatmul.f32.gmra.mxu0 %v1032
    %v1117 = vpop.f32.mrf.mxu0
    %v1118 = vadd.f32 0.0, %v1117
    %1119 = vdwg.mxu0
    %v1120 = vadd.f32 %v1036, %v1058
    %v1121 = vadd.f32 %v1037, %v1078
    %v1122 = vadd.f32 %v1038, %v1098
    %v1123 = vadd.f32 %v1039, %v1118
    %v1124 = vxor.u32 %v1120, 2147483648
    %v1125 = vmul.f32 %v1124, 1.442695
    %v1126 = vpow.pop %v1125
    %v1127 = vadd.f32 %v1126, 1.0
    %v1128 = vrcp.pop %v1127
    %v1129 = vmul.f32 %v1127, %v1128
    %v1130 = vsub.f32 1.0, %v1129
    %v1131 = vmul.f32 %v1128, %v1130
    %v1132 = vadd.f32 %v1128, %v1131
    %vm1133 = vweird.f32 %v1127
    %vm1134 = vweird.f32 %v1128
    %vm1135 = vmor %vm1133, %vm1134
    %v1136 = vsel %vm1135, %v1128, %v1132
    %v1137 = vand.u32 2147483647, %v1127
    %vm1138 = vcmp.eq.f32.partialorder %v1137, 8.507059e+37
    %v1139 = vand.u32 %v1127, 2147483648
    %v1140 = vor.u32 1.1754944e-38, %v1139
    %v1141 = vsel %vm1138, %v1140, %v1136
    %v1142 = vmul.f32 1.0, %v1141
    %v1143 = vxor.u32 %v1121, 2147483648
    %v1144 = vmul.f32 %v1143, 1.442695
    %v1145 = vpow.pop %v1144
    %v1146 = vadd.f32 %v1145, 1.0
    %v1147 = vrcp.pop %v1146
    %v1148 = vmul.f32 %v1146, %v1147
    %v1149 = vsub.f32 1.0, %v1148
    %v1150 = vmul.f32 %v1147, %v1149
    %v1151 = vadd.f32 %v1147, %v1150
    %vm1152 = vweird.f32 %v1146
    %vm1153 = vweird.f32 %v1147
    %vm1154 = vmor %vm1152, %vm1153
    %v1155 = vsel %vm1154, %v1147, %v1151
    %v1156 = vand.u32 2147483647, %v1146
    %vm1157 = vcmp.eq.f32.partialorder %v1156, 8.507059e+37
    %v1158 = vand.u32 %v1146, 2147483648
    %v1159 = vor.u32 1.1754944e-38, %v1158
    %v1160 = vsel %vm1157, %v1159, %v1155
    %v1161 = vmul.f32 1.0, %v1160
    %v1162 = vtanh.pop %v1122
    %v1163 = vxor.u32 %v1123, 2147483648
    %v1164 = vmul.f32 %v1163, 1.442695
    %v1165 = vpow.pop %v1164
    %v1166 = vadd.f32 %v1165, 1.0
    %v1167 = vrcp.pop %v1166
    %v1168 = vmul.f32 %v1166, %v1167
    %v1169 = vsub.f32 1.0, %v1168
    %v1170 = vmul.f32 %v1167, %v1169
    %v1171 = vadd.f32 %v1167, %v1170
    %vm1172 = vweird.f32 %v1166
    %vm1173 = vweird.f32 %v1167
    %vm1174 = vmor %vm1172, %vm1173
    %v1175 = vsel %vm1174, %v1167, %v1171
    %v1176 = vand.u32 2147483647, %v1166
    %vm1177 = vcmp.eq.f32.partialorder %v1176, 8.507059e+37
    %v1178 = vand.u32 %v1166, 2147483648
    %v1179 = vor.u32 1.1754944e-38, %v1178
    %v1180 = vsel %vm1177, %v1179, %v1175
    %v1181 = vmul.f32 1.0, %v1180
    %v1182 = vmul.f32 %v1161, %v1030
    %v1183 = vmul.f32 %v1142, %v1162
    %v1184 = vadd.f32 %v1182, %v1183
    %v1185 = vtanh.pop %v1184
    %v1186 = vmul.f32 %v1181, %v1185
    %s1187 = scalar_lea.vmem [#allocation11], 32
    %1188 = vst [vmem:[%s1187] sm:$0xff] %v1186
    %s1189 = scalar_lea.vmem [#allocation2], 160
    %v1190 = vld [vmem:[%s1189] sm:$0xff]
    %v1191 = vld [vmem:[%s1189 + $0x8] sm:$0xff]
    %v1192 = vld [vmem:[%s1189 + $0x10] sm:$0xff]
    %v1193 = vld [vmem:[%s1189 + $0x18] sm:$0xff]
    %1194 = vmatpush.msra.mxu0 %v417
    %1195 = vmatpush.msra.mxu0 %v413
    %1196 = vmatpush.msra.mxu0 %v409
    %1197 = vmatpush.msra.mxu0 %v405
    %1198 = vmatpush.msra.mxu0 %v401
    %1199 = vmatpush.msra.mxu0 %v397
    %1200 = vmatpush.msra.mxu0 %v393
    %1201 = vmatpush.msra.mxu0 %v389
    %1202 = vmatpush.msra.mxu0 %v385
    %1203 = vmatpush.msra.mxu0 %v381
    %1204 = vmatpush.msra.mxu0 %v377
    %1205 = vmatpush.msra.mxu0 %v373
    %1206 = vmatpush.msra.mxu0 %v369
    %1207 = vmatpush.msra.mxu0 %v365
    %1208 = vmatpush.msra.mxu0 %v361
    %1209 = vmatpush.msra.mxu0 %v357
    %1210 = vmatmul.f32.gmra.mxu0 %v1186
    %v1211 = vpop.f32.mrf.mxu0
    %v1212 = vadd.f32 0.0, %v1211
    %1213 = vdwg.mxu0
    %1214 = vmatpush.msra.mxu0 %v418
    %1215 = vmatpush.msra.mxu0 %v414
    %1216 = vmatpush.msra.mxu0 %v410
    %1217 = vmatpush.msra.mxu0 %v406
    %1218 = vmatpush.msra.mxu0 %v402
    %1219 = vmatpush.msra.mxu0 %v398
    %1220 = vmatpush.msra.mxu0 %v394
    %1221 = vmatpush.msra.mxu0 %v390
    %1222 = vmatpush.msra.mxu0 %v386
    %1223 = vmatpush.msra.mxu0 %v382
    %1224 = vmatpush.msra.mxu0 %v378
    %1225 = vmatpush.msra.mxu0 %v374
    %1226 = vmatpush.msra.mxu0 %v370
    %1227 = vmatpush.msra.mxu0 %v366
    %1228 = vmatpush.msra.mxu0 %v362
    %1229 = vmatpush.msra.mxu0 %v358
    %1230 = vmatmul.f32.gmra.mxu0 %v1186
    %v1231 = vpop.f32.mrf.mxu0
    %v1232 = vadd.f32 0.0, %v1231
    %1233 = vdwg.mxu0
    %1234 = vmatpush.msra.mxu0 %v419
    %1235 = vmatpush.msra.mxu0 %v415
    %1236 = vmatpush.msra.mxu0 %v411
    %1237 = vmatpush.msra.mxu0 %v407
    %1238 = vmatpush.msra.mxu0 %v403
    %1239 = vmatpush.msra.mxu0 %v399
    %1240 = vmatpush.msra.mxu0 %v395
    %1241 = vmatpush.msra.mxu0 %v391
    %1242 = vmatpush.msra.mxu0 %v387
    %1243 = vmatpush.msra.mxu0 %v383
    %1244 = vmatpush.msra.mxu0 %v379
    %1245 = vmatpush.msra.mxu0 %v375
    %1246 = vmatpush.msra.mxu0 %v371
    %1247 = vmatpush.msra.mxu0 %v367
    %1248 = vmatpush.msra.mxu0 %v363
    %1249 = vmatpush.msra.mxu0 %v359
    %1250 = vmatmul.f32.gmra.mxu0 %v1186
    %v1251 = vpop.f32.mrf.mxu0
    %v1252 = vadd.f32 0.0, %v1251
    %1253 = vdwg.mxu0
    %1254 = vmatpush.msra.mxu0 %v420
    %1255 = vmatpush.msra.mxu0 %v416
    %1256 = vmatpush.msra.mxu0 %v412
    %1257 = vmatpush.msra.mxu0 %v408
    %1258 = vmatpush.msra.mxu0 %v404
    %1259 = vmatpush.msra.mxu0 %v400
    %1260 = vmatpush.msra.mxu0 %v396
    %1261 = vmatpush.msra.mxu0 %v392
    %1262 = vmatpush.msra.mxu0 %v388
    %1263 = vmatpush.msra.mxu0 %v384
    %1264 = vmatpush.msra.mxu0 %v380
    %1265 = vmatpush.msra.mxu0 %v376
    %1266 = vmatpush.msra.mxu0 %v372
    %1267 = vmatpush.msra.mxu0 %v368
    %1268 = vmatpush.msra.mxu0 %v364
    %1269 = vmatpush.msra.mxu0 %v360
    %1270 = vmatmul.f32.gmra.mxu0 %v1186
    %v1271 = vpop.f32.mrf.mxu0
    %v1272 = vadd.f32 0.0, %v1271
    %1273 = vdwg.mxu0
    %v1274 = vadd.f32 %v1190, %v1212
    %v1275 = vadd.f32 %v1191, %v1232
    %v1276 = vadd.f32 %v1192, %v1252
    %v1277 = vadd.f32 %v1193, %v1272
    %v1278 = vxor.u32 %v1274, 2147483648
    %v1279 = vmul.f32 %v1278, 1.442695
    %v1280 = vpow.pop %v1279
    %v1281 = vadd.f32 %v1280, 1.0
    %v1282 = vrcp.pop %v1281
    %v1283 = vmul.f32 %v1281, %v1282
    %v1284 = vsub.f32 1.0, %v1283
    %v1285 = vmul.f32 %v1282, %v1284
    %v1286 = vadd.f32 %v1282, %v1285
    %vm1287 = vweird.f32 %v1281
    %vm1288 = vweird.f32 %v1282
    %vm1289 = vmor %vm1287, %vm1288
    %v1290 = vsel %vm1289, %v1282, %v1286
    %v1291 = vand.u32 2147483647, %v1281
    %vm1292 = vcmp.eq.f32.partialorder %v1291, 8.507059e+37
    %v1293 = vand.u32 %v1281, 2147483648
    %v1294 = vor.u32 1.1754944e-38, %v1293
    %v1295 = vsel %vm1292, %v1294, %v1290
    %v1296 = vmul.f32 1.0, %v1295
    %v1297 = vxor.u32 %v1275, 2147483648
    %v1298 = vmul.f32 %v1297, 1.442695
    %v1299 = vpow.pop %v1298
    %v1300 = vadd.f32 %v1299, 1.0
    %v1301 = vrcp.pop %v1300
    %v1302 = vmul.f32 %v1300, %v1301
    %v1303 = vsub.f32 1.0, %v1302
    %v1304 = vmul.f32 %v1301, %v1303
    %v1305 = vadd.f32 %v1301, %v1304
    %vm1306 = vweird.f32 %v1300
    %vm1307 = vweird.f32 %v1301
    %vm1308 = vmor %vm1306, %vm1307
    %v1309 = vsel %vm1308, %v1301, %v1305
    %v1310 = vand.u32 2147483647, %v1300
    %vm1311 = vcmp.eq.f32.partialorder %v1310, 8.507059e+37
    %v1312 = vand.u32 %v1300, 2147483648
    %v1313 = vor.u32 1.1754944e-38, %v1312
    %v1314 = vsel %vm1311, %v1313, %v1309
    %v1315 = vmul.f32 1.0, %v1314
    %v1316 = vtanh.pop %v1276
    %v1317 = vxor.u32 %v1277, 2147483648
    %v1318 = vmul.f32 %v1317, 1.442695
    %v1319 = vpow.pop %v1318
    %v1320 = vadd.f32 %v1319, 1.0
    %v1321 = vrcp.pop %v1320
    %v1322 = vmul.f32 %v1320, %v1321
    %v1323 = vsub.f32 1.0, %v1322
    %v1324 = vmul.f32 %v1321, %v1323
    %v1325 = vadd.f32 %v1321, %v1324
    %vm1326 = vweird.f32 %v1320
    %vm1327 = vweird.f32 %v1321
    %vm1328 = vmor %vm1326, %vm1327
    %v1329 = vsel %vm1328, %v1321, %v1325
    %v1330 = vand.u32 2147483647, %v1320
    %vm1331 = vcmp.eq.f32.partialorder %v1330, 8.507059e+37
    %v1332 = vand.u32 %v1320, 2147483648
    %v1333 = vor.u32 1.1754944e-38, %v1332
    %v1334 = vsel %vm1331, %v1333, %v1329
    %v1335 = vmul.f32 1.0, %v1334
    %v1336 = vmul.f32 %v1315, %v1184
    %v1337 = vmul.f32 %v1296, %v1316
    %v1338 = vadd.f32 %v1336, %v1337
    %v1339 = vtanh.pop %v1338
    %v1340 = vmul.f32 %v1335, %v1339
    %s1341 = scalar_lea.vmem [#allocation11], 40
    %1342 = vst [vmem:[%s1341] sm:$0xff] %v1340
    %s1343 = scalar_lea.vmem [#allocation2], 192
    %v1344 = vld [vmem:[%s1343] sm:$0xff]
    %v1345 = vld [vmem:[%s1343 + $0x8] sm:$0xff]
    %v1346 = vld [vmem:[%s1343 + $0x10] sm:$0xff]
    %v1347 = vld [vmem:[%s1343 + $0x18] sm:$0xff]
    %1348 = vmatpush.msra.mxu0 %v417
    %1349 = vmatpush.msra.mxu0 %v413
    %1350 = vmatpush.msra.mxu0 %v409
    %1351 = vmatpush.msra.mxu0 %v405
    %1352 = vmatpush.msra.mxu0 %v401
    %1353 = vmatpush.msra.mxu0 %v397
    %1354 = vmatpush.msra.mxu0 %v393
    %1355 = vmatpush.msra.mxu0 %v389
    %1356 = vmatpush.msra.mxu0 %v385
    %1357 = vmatpush.msra.mxu0 %v381
    %1358 = vmatpush.msra.mxu0 %v377
    %1359 = vmatpush.msra.mxu0 %v373
    %1360 = vmatpush.msra.mxu0 %v369
    %1361 = vmatpush.msra.mxu0 %v365
    %1362 = vmatpush.msra.mxu0 %v361
    %1363 = vmatpush.msra.mxu0 %v357
    %1364 = vmatmul.f32.gmra.mxu0 %v1340
    %v1365 = vpop.f32.mrf.mxu0
    %v1366 = vadd.f32 0.0, %v1365
    %1367 = vdwg.mxu0
    %1368 = vmatpush.msra.mxu0 %v418
    %1369 = vmatpush.msra.mxu0 %v414
    %1370 = vmatpush.msra.mxu0 %v410
    %1371 = vmatpush.msra.mxu0 %v406
    %1372 = vmatpush.msra.mxu0 %v402
    %1373 = vmatpush.msra.mxu0 %v398
    %1374 = vmatpush.msra.mxu0 %v394
    %1375 = vmatpush.msra.mxu0 %v390
    %1376 = vmatpush.msra.mxu0 %v386
    %1377 = vmatpush.msra.mxu0 %v382
    %1378 = vmatpush.msra.mxu0 %v378
    %1379 = vmatpush.msra.mxu0 %v374
    %1380 = vmatpush.msra.mxu0 %v370
    %1381 = vmatpush.msra.mxu0 %v366
    %1382 = vmatpush.msra.mxu0 %v362
    %1383 = vmatpush.msra.mxu0 %v358
    %1384 = vmatmul.f32.gmra.mxu0 %v1340
    %v1385 = vpop.f32.mrf.mxu0
    %v1386 = vadd.f32 0.0, %v1385
    %1387 = vdwg.mxu0
    %1388 = vmatpush.msra.mxu0 %v419
    %1389 = vmatpush.msra.mxu0 %v415
    %1390 = vmatpush.msra.mxu0 %v411
    %1391 = vmatpush.msra.mxu0 %v407
    %1392 = vmatpush.msra.mxu0 %v403
    %1393 = vmatpush.msra.mxu0 %v399
    %1394 = vmatpush.msra.mxu0 %v395
    %1395 = vmatpush.msra.mxu0 %v391
    %1396 = vmatpush.msra.mxu0 %v387
    %1397 = vmatpush.msra.mxu0 %v383
    %1398 = vmatpush.msra.mxu0 %v379
    %1399 = vmatpush.msra.mxu0 %v375
    %1400 = vmatpush.msra.mxu0 %v371
    %1401 = vmatpush.msra.mxu0 %v367
    %1402 = vmatpush.msra.mxu0 %v363
    %1403 = vmatpush.msra.mxu0 %v359
    %1404 = vmatmul.f32.gmra.mxu0 %v1340
    %v1405 = vpop.f32.mrf.mxu0
    %v1406 = vadd.f32 0.0, %v1405
    %1407 = vdwg.mxu0
    %1408 = vmatpush.msra.mxu0 %v420
    %1409 = vmatpush.msra.mxu0 %v416
    %1410 = vmatpush.msra.mxu0 %v412
    %1411 = vmatpush.msra.mxu0 %v408
    %1412 = vmatpush.msra.mxu0 %v404
    %1413 = vmatpush.msra.mxu0 %v400
    %1414 = vmatpush.msra.mxu0 %v396
    %1415 = vmatpush.msra.mxu0 %v392
    %1416 = vmatpush.msra.mxu0 %v388
    %1417 = vmatpush.msra.mxu0 %v384
    %1418 = vmatpush.msra.mxu0 %v380
    %1419 = vmatpush.msra.mxu0 %v376
    %1420 = vmatpush.msra.mxu0 %v372
    %1421 = vmatpush.msra.mxu0 %v368
    %1422 = vmatpush.msra.mxu0 %v364
    %1423 = vmatpush.msra.mxu0 %v360
    %1424 = vmatmul.f32.gmra.mxu0 %v1340
    %v1425 = vpop.f32.mrf.mxu0
    %v1426 = vadd.f32 0.0, %v1425
    %1427 = vdwg.mxu0
    %v1428 = vadd.f32 %v1344, %v1366
    %v1429 = vadd.f32 %v1345, %v1386
    %v1430 = vadd.f32 %v1346, %v1406
    %v1431 = vadd.f32 %v1347, %v1426
    %v1432 = vxor.u32 %v1428, 2147483648
    %v1433 = vmul.f32 %v1432, 1.442695
    %v1434 = vpow.pop %v1433
    %v1435 = vadd.f32 %v1434, 1.0
    %v1436 = vrcp.pop %v1435
    %v1437 = vmul.f32 %v1435, %v1436
    %v1438 = vsub.f32 1.0, %v1437
    %v1439 = vmul.f32 %v1436, %v1438
    %v1440 = vadd.f32 %v1436, %v1439
    %vm1441 = vweird.f32 %v1435
    %vm1442 = vweird.f32 %v1436
    %vm1443 = vmor %vm1441, %vm1442
    %v1444 = vsel %vm1443, %v1436, %v1440
    %v1445 = vand.u32 2147483647, %v1435
    %vm1446 = vcmp.eq.f32.partialorder %v1445, 8.507059e+37
    %v1447 = vand.u32 %v1435, 2147483648
    %v1448 = vor.u32 1.1754944e-38, %v1447
    %v1449 = vsel %vm1446, %v1448, %v1444
    %v1450 = vmul.f32 1.0, %v1449
    %v1451 = vxor.u32 %v1429, 2147483648
    %v1452 = vmul.f32 %v1451, 1.442695
    %v1453 = vpow.pop %v1452
    %v1454 = vadd.f32 %v1453, 1.0
    %v1455 = vrcp.pop %v1454
    %v1456 = vmul.f32 %v1454, %v1455
    %v1457 = vsub.f32 1.0, %v1456
    %v1458 = vmul.f32 %v1455, %v1457
    %v1459 = vadd.f32 %v1455, %v1458
    %vm1460 = vweird.f32 %v1454
    %vm1461 = vweird.f32 %v1455
    %vm1462 = vmor %vm1460, %vm1461
    %v1463 = vsel %vm1462, %v1455, %v1459
    %v1464 = vand.u32 2147483647, %v1454
    %vm1465 = vcmp.eq.f32.partialorder %v1464, 8.507059e+37
    %v1466 = vand.u32 %v1454, 2147483648
    %v1467 = vor.u32 1.1754944e-38, %v1466
    %v1468 = vsel %vm1465, %v1467, %v1463
    %v1469 = vmul.f32 1.0, %v1468
    %v1470 = vtanh.pop %v1430
    %v1471 = vxor.u32 %v1431, 2147483648
    %v1472 = vmul.f32 %v1471, 1.442695
    %v1473 = vpow.pop %v1472
    %v1474 = vadd.f32 %v1473, 1.0
    %v1475 = vrcp.pop %v1474
    %v1476 = vmul.f32 %v1474, %v1475
    %v1477 = vsub.f32 1.0, %v1476
    %v1478 = vmul.f32 %v1475, %v1477
    %v1479 = vadd.f32 %v1475, %v1478
    %vm1480 = vweird.f32 %v1474
    %vm1481 = vweird.f32 %v1475
    %vm1482 = vmor %vm1480, %vm1481
    %v1483 = vsel %vm1482, %v1475, %v1479
    %v1484 = vand.u32 2147483647, %v1474
    %vm1485 = vcmp.eq.f32.partialorder %v1484, 8.507059e+37
    %v1486 = vand.u32 %v1474, 2147483648
    %v1487 = vor.u32 1.1754944e-38, %v1486
    %v1488 = vsel %vm1485, %v1487, %v1483
    %v1489 = vmul.f32 1.0, %v1488
    %v1490 = vmul.f32 %v1469, %v1338
    %v1491 = vmul.f32 %v1450, %v1470
    %v1492 = vadd.f32 %v1490, %v1491
    %v1493 = vtanh.pop %v1492
    %v1494 = vmul.f32 %v1489, %v1493
    %s1495 = scalar_lea.vmem [#allocation11], 48
    %1496 = vst [vmem:[%s1495] sm:$0xff] %v1494
    %s1497 = scalar_lea.vmem [#allocation2], 224
    %v1498 = vld [vmem:[%s1497] sm:$0xff]
    %v1499 = vld [vmem:[%s1497 + $0x8] sm:$0xff]
    %v1500 = vld [vmem:[%s1497 + $0x10] sm:$0xff]
    %v1501 = vld [vmem:[%s1497 + $0x18] sm:$0xff]
    %1502 = vmatpush.msra.mxu0 %v417
    %1503 = vmatpush.msra.mxu0 %v413
    %1504 = vmatpush.msra.mxu0 %v409
    %1505 = vmatpush.msra.mxu0 %v405
    %1506 = vmatpush.msra.mxu0 %v401
    %1507 = vmatpush.msra.mxu0 %v397
    %1508 = vmatpush.msra.mxu0 %v393
    %1509 = vmatpush.msra.mxu0 %v389
    %1510 = vmatpush.msra.mxu0 %v385
    %1511 = vmatpush.msra.mxu0 %v381
    %1512 = vmatpush.msra.mxu0 %v377
    %1513 = vmatpush.msra.mxu0 %v373
    %1514 = vmatpush.msra.mxu0 %v369
    %1515 = vmatpush.msra.mxu0 %v365
    %1516 = vmatpush.msra.mxu0 %v361
    %1517 = vmatpush.msra.mxu0 %v357
    %1518 = vmatmul.f32.gmra.mxu0 %v1494
    %v1519 = vpop.f32.mrf.mxu0
    %v1520 = vadd.f32 0.0, %v1519
    %1521 = vdwg.mxu0
    %1522 = vmatpush.msra.mxu0 %v418
    %1523 = vmatpush.msra.mxu0 %v414
    %1524 = vmatpush.msra.mxu0 %v410
    %1525 = vmatpush.msra.mxu0 %v406
    %1526 = vmatpush.msra.mxu0 %v402
    %1527 = vmatpush.msra.mxu0 %v398
    %1528 = vmatpush.msra.mxu0 %v394
    %1529 = vmatpush.msra.mxu0 %v390
    %1530 = vmatpush.msra.mxu0 %v386
    %1531 = vmatpush.msra.mxu0 %v382
    %1532 = vmatpush.msra.mxu0 %v378
    %1533 = vmatpush.msra.mxu0 %v374
    %1534 = vmatpush.msra.mxu0 %v370
    %1535 = vmatpush.msra.mxu0 %v366
    %1536 = vmatpush.msra.mxu0 %v362
    %1537 = vmatpush.msra.mxu0 %v358
    %1538 = vmatmul.f32.gmra.mxu0 %v1494
    %v1539 = vpop.f32.mrf.mxu0
    %v1540 = vadd.f32 0.0, %v1539
    %1541 = vdwg.mxu0
    %1542 = vmatpush.msra.mxu0 %v419
    %1543 = vmatpush.msra.mxu0 %v415
    %1544 = vmatpush.msra.mxu0 %v411
    %1545 = vmatpush.msra.mxu0 %v407
    %1546 = vmatpush.msra.mxu0 %v403
    %1547 = vmatpush.msra.mxu0 %v399
    %1548 = vmatpush.msra.mxu0 %v395
    %1549 = vmatpush.msra.mxu0 %v391
    %1550 = vmatpush.msra.mxu0 %v387
    %1551 = vmatpush.msra.mxu0 %v383
    %1552 = vmatpush.msra.mxu0 %v379
    %1553 = vmatpush.msra.mxu0 %v375
    %1554 = vmatpush.msra.mxu0 %v371
    %1555 = vmatpush.msra.mxu0 %v367
    %1556 = vmatpush.msra.mxu0 %v363
    %1557 = vmatpush.msra.mxu0 %v359
    %1558 = vmatmul.f32.gmra.mxu0 %v1494
    %v1559 = vpop.f32.mrf.mxu0
    %v1560 = vadd.f32 0.0, %v1559
    %1561 = vdwg.mxu0
    %1562 = vmatpush.msra.mxu0 %v420
    %1563 = vmatpush.msra.mxu0 %v416
    %1564 = vmatpush.msra.mxu0 %v412
    %1565 = vmatpush.msra.mxu0 %v408
    %1566 = vmatpush.msra.mxu0 %v404
    %1567 = vmatpush.msra.mxu0 %v400
    %1568 = vmatpush.msra.mxu0 %v396
    %1569 = vmatpush.msra.mxu0 %v392
    %1570 = vmatpush.msra.mxu0 %v388
    %1571 = vmatpush.msra.mxu0 %v384
    %1572 = vmatpush.msra.mxu0 %v380
    %1573 = vmatpush.msra.mxu0 %v376
    %1574 = vmatpush.msra.mxu0 %v372
    %1575 = vmatpush.msra.mxu0 %v368
    %1576 = vmatpush.msra.mxu0 %v364
    %1577 = vmatpush.msra.mxu0 %v360
    %1578 = vmatmul.f32.gmra.mxu0 %v1494
    %v1579 = vpop.f32.mrf.mxu0
    %v1580 = vadd.f32 0.0, %v1579
    %1581 = vdwg.mxu0
    %v1582 = vadd.f32 %v1498, %v1520
    %v1583 = vadd.f32 %v1499, %v1540
    %v1584 = vadd.f32 %v1500, %v1560
    %v1585 = vadd.f32 %v1501, %v1580
    %v1586 = vxor.u32 %v1582, 2147483648
    %v1587 = vmul.f32 %v1586, 1.442695
    %v1588 = vpow.pop %v1587
    %v1589 = vadd.f32 %v1588, 1.0
    %v1590 = vrcp.pop %v1589
    %v1591 = vmul.f32 %v1589, %v1590
    %v1592 = vsub.f32 1.0, %v1591
    %v1593 = vmul.f32 %v1590, %v1592
    %v1594 = vadd.f32 %v1590, %v1593
    %vm1595 = vweird.f32 %v1589
    %vm1596 = vweird.f32 %v1590
    %vm1597 = vmor %vm1595, %vm1596
    %v1598 = vsel %vm1597, %v1590, %v1594
    %v1599 = vand.u32 2147483647, %v1589
    %vm1600 = vcmp.eq.f32.partialorder %v1599, 8.507059e+37
    %v1601 = vand.u32 %v1589, 2147483648
    %v1602 = vor.u32 1.1754944e-38, %v1601
    %v1603 = vsel %vm1600, %v1602, %v1598
    %v1604 = vmul.f32 1.0, %v1603
    %v1605 = vxor.u32 %v1583, 2147483648
    %v1606 = vmul.f32 %v1605, 1.442695
    %v1607 = vpow.pop %v1606
    %v1608 = vadd.f32 %v1607, 1.0
    %v1609 = vrcp.pop %v1608
    %v1610 = vmul.f32 %v1608, %v1609
    %v1611 = vsub.f32 1.0, %v1610
    %v1612 = vmul.f32 %v1609, %v1611
    %v1613 = vadd.f32 %v1609, %v1612
    %vm1614 = vweird.f32 %v1608
    %vm1615 = vweird.f32 %v1609
    %vm1616 = vmor %vm1614, %vm1615
    %v1617 = vsel %vm1616, %v1609, %v1613
    %v1618 = vand.u32 2147483647, %v1608
    %vm1619 = vcmp.eq.f32.partialorder %v1618, 8.507059e+37
    %v1620 = vand.u32 %v1608, 2147483648
    %v1621 = vor.u32 1.1754944e-38, %v1620
    %v1622 = vsel %vm1619, %v1621, %v1617
    %v1623 = vmul.f32 1.0, %v1622
    %v1624 = vtanh.pop %v1584
    %v1625 = vxor.u32 %v1585, 2147483648
    %v1626 = vmul.f32 %v1625, 1.442695
    %v1627 = vpow.pop %v1626
    %v1628 = vadd.f32 %v1627, 1.0
    %v1629 = vrcp.pop %v1628
    %v1630 = vmul.f32 %v1628, %v1629
    %v1631 = vsub.f32 1.0, %v1630
    %v1632 = vmul.f32 %v1629, %v1631
    %v1633 = vadd.f32 %v1629, %v1632
    %vm1634 = vweird.f32 %v1628
    %vm1635 = vweird.f32 %v1629
    %vm1636 = vmor %vm1634, %vm1635
    %v1637 = vsel %vm1636, %v1629, %v1633
    %v1638 = vand.u32 2147483647, %v1628
    %vm1639 = vcmp.eq.f32.partialorder %v1638, 8.507059e+37
    %v1640 = vand.u32 %v1628, 2147483648
    %v1641 = vor.u32 1.1754944e-38, %v1640
    %v1642 = vsel %vm1639, %v1641, %v1637
    %v1643 = vmul.f32 1.0, %v1642
    %v1644 = vmul.f32 %v1623, %v1492
    %v1645 = vmul.f32 %v1604, %v1624
    %v1646 = vadd.f32 %v1644, %v1645
    %v1647 = vtanh.pop %v1646
    %v1648 = vmul.f32 %v1643, %v1647
    %s1649 = scalar_lea.vmem [#allocation11], 56
    %1650 = vst [vmem:[%s1649] sm:$0xff] %v1648
    // Predicated region
    $region34: #{tpu_custom_call.1} parent=1 // pred_check
      _
    $region35: #{tpu_custom_call.1} parent=1 // pred_check_branch
      %1652 = sbr.rel (0) target = $region37
    $region36: #{tpu_custom_call.1} parent=1 // pred_region
      %1654 = vsyncadd [#allocation5], 0
      %s1655 = sshll.u32 [#allocation11], 4
      %s1656 = int_to_ptr.vmem [resolvable:$true] %s1655
      %s1657 = sshll.u32 %s4, 4
      %s1658 = int_to_ptr.hbm [resolvable:$true] %s1657
      %1663 = dma.vmem_to_hbm [thread:$0]  %s1656, 1024, %s1658, [#allocation5], 128, 128, 8
    $region37: #{tpu_custom_call.1} parent=1 // pred_fallthru
      _
    // Predicated region
    $region38: #{tpu_custom_call.1} parent=1 // pred_check
      _
    $region39: #{tpu_custom_call.1} parent=1 // pred_check_branch
      %1665 = sbr.rel (0) target = $region41
    $region40: #{tpu_custom_call.1} parent=1 // pred_region
      %1667 = dma.done [#allocation5], 1024
    $region41: #{tpu_custom_call.1} parent=1 // pred_fallthru
      _
    %1668 = vsyncpa [#allocation4], 1
    %1669 = vsyncpa [#allocation7], 1
    %1670 = vsyncpa [#allocation10], 1
    %1671 = vsyncpa [#allocation5], 1

</llo_original>
